<compile_context>
chip_gen: v7x
topology: tpu7x:2x2x1
jax: 0.10.0
libtpu: 0.0.40
codegen_flags: <defaults>
</compile_context>

<pallas_src>
import functools

import numpy as np
import jax
import jax.numpy as jnp
from jax.experimental import pallas as pl
from jax.experimental.pallas import tpu as pltpu


def _gelu_tanh(x):
    # GELU (tanh approximation) — representative `activation` passed to _Expert.
    return 0.5 * x * (1.0 + jnp.tanh(0.7978845608028654 * (x + 0.044715 * x * x * x)))


def _expert_kernel(eid_ref, nvalid_ref, x_ref, w1_ref, b1_ref, w2_ref, b2_ref,
                   o_ref, acc_ref):
    """Fused expert MLP with d_hidden tiling.

    Grid = (token_tile i [parallel], hidden_block k [arbitrary/reduction]).

    eid_ref    : SMEM int32[num_tiles]  (scalar prefetch; consumed by index_maps)
    nvalid_ref : SMEM int32[1]          (scalar prefetch; # of real token tiles)
    x_ref      : VMEM (tm, d_model)        bf16
    w1_ref     : VMEM (1, d_model, th)     bf16   expert/hidden-block slice
    b1_ref     : VMEM (1, 1, th)           f32
    w2_ref     : VMEM (1, th, d_model)     bf16
    b2_ref     : VMEM (1, 1, d_model)      f32
    o_ref      : VMEM (tm, d_model)        bf16 output
    acc_ref    : VMEM (tm, d_model)        f32 accumulator (resident across k)
    """
    i = pl.program_id(0)
    k = pl.program_id(1)

    # Phantom tiles (capacity-bucket padding) are skipped entirely: their input
    # is zeros and their output rows are never gathered by the wrapper.
    @pl.when(i < nvalid_ref[0])
    def _valid_tile():
        @pl.when(k == 0)
        def _init():
            # Initialize the accumulator with the output bias b2.
            acc_ref[...] = jnp.broadcast_to(b2_ref[0], acc_ref.shape)

        x = x_ref[...]                                                 # bf16 (tm, d_model)
        # First projection: bf16 x bf16 -> f32 accumulate on the MXU.
        h = jnp.dot(x, w1_ref[0], preferred_element_type=jnp.float32)  # f32 (tm, th)
        h = h + b1_ref[0]                                              # f32 bias
        h = _gelu_tanh(h)                                              # f32 activation
        # Second projection: cast activation back to bf16 for the MXU, f32 acc.
        acc_ref[...] += jnp.dot(h.astype(w2_ref.dtype), w2_ref[0],
                                preferred_element_type=jnp.float32)

        @pl.when(k == pl.num_programs(1) - 1)
        def _finalize():
            o_ref[...] = acc_ref[...].astype(o_ref.dtype)


@functools.partial(jax.jit, static_argnames=("tm", "th", "vmem_limit"))
def _expert_pallas(tile_eids, nvalid, x_pad, w1t, b1, w2t, b2, *, tm, th, vmem_limit):
    padded_tokens, d_model = x_pad.shape
    num_expert, _, d_hidden = w1t.shape
    num_tiles = padded_tokens // tm
    num_h_blocks = d_hidden // th

    grid_spec = pltpu.PrefetchScalarGridSpec(
        num_scalar_prefetch=2,
        grid=(num_tiles, num_h_blocks),
        in_specs=[
            # x tile: same block across the hidden-reduction axis (stays resident).
            pl.BlockSpec((tm, d_model), lambda i, k, eid, nv: (i, 0)),
            # W1 slice: expert picked by the prefetched per-tile expert id,
            # hidden block picked by k.
            pl.BlockSpec((1, d_model, th), lambda i, k, eid, nv: (eid[i], 0, k)),
            pl.BlockSpec((1, 1, th), lambda i, k, eid, nv: (eid[i], 0, k)),
            # W2 slice: same expert, hidden block along the contraction dim.
            pl.BlockSpec((1, th, d_model), lambda i, k, eid, nv: (eid[i], k, 0)),
            pl.BlockSpec((1, 1, d_model), lambda i, k, eid, nv: (eid[i], 0, 0)),
        ],
        out_specs=pl.BlockSpec((tm, d_model), lambda i, k, eid, nv: (i, 0)),
        scratch_shapes=[pltpu.VMEM((tm, d_model), jnp.float32)],
    )

    return pl.pallas_call(
        _expert_kernel,
        # bf16 output: halves HBM writeback and the post-kernel gather traffic.
        out_shape=jax.ShapeDtypeStruct((padded_tokens, d_model), jnp.bfloat16),
        grid_spec=grid_spec,
        compiler_params=pltpu.CompilerParams(
            # Token-tile axis is embarrassingly parallel (megacore on v7x);
            # hidden axis is a reduction into the resident accumulator.
            dimension_semantics=("parallel", "arbitrary"),
            vmem_limit_bytes=vmem_limit,
        ),
    )(tile_eids, nvalid, x_pad, w1t, b1, w2t, b2)


def prepare_expert_params(params, compute_dtype=jnp.bfloat16):
    """One-time weight preparation (hoisted out of the forward hot path).

    params: PyTorch FMoELinear layout
        w1 (E, d_hidden, d_model), b1 (E, d_hidden),
        w2 (E, d_model, d_hidden), b2 (E, d_model)
    Returns pre-transposed, bf16 weights + f32 biases, kernel-ready.
    """
    w1t = jnp.transpose(params["w1"], (0, 2, 1)).astype(compute_dtype)  # (E, d_model, d_hidden)
    w2t = jnp.transpose(params["w2"], (0, 2, 1)).astype(compute_dtype)  # (E, d_hidden, d_model)
    num_expert, d_model, d_hidden = w1t.shape
    b1 = params["b1"].astype(jnp.float32).reshape(num_expert, 1, d_hidden)
    b2 = params["b2"].astype(jnp.float32).reshape(num_expert, 1, d_model)
    return {"w1t": w1t, "b1": b1, "w2t": w2t, "b2": b2}


# ---------------------------------------------------------------------------
# Device-aware tile / VMEM-budget selection
# ---------------------------------------------------------------------------

def _device_profile():
    """Per-generation VMEM budget, preferred token tile and hidden-tile alignment."""
    vmem_cap = None
    try:
        vmem_cap = int(pltpu.get_tpu_info().vmem_capacity_bytes)
    except Exception:
        vmem_cap = None
    kind = ""
    try:
        kind = jax.devices()[0].device_kind.lower()
    except Exception:
        pass

    if "v5 lite" in kind or "v5e" in kind or "v5litepod" in kind:
        # v5e: knee ~240 flops/byte -> tm=256 already near compute bound;
        # 128 MiB physical VMEM, 4x128^2 MXU -> 128-aligned th is fine.
        default_cap, tm_pref, th_align = 128 << 20, 256, 128
    elif "v6" in kind or "trillium" in kind:
        # v6e: knee ~680 flops/byte -> need tm~512; 128 MiB VMEM; 2x256^2 MXU.
        default_cap, tm_pref, th_align = 128 << 20, 512, 256
    elif "v7" in kind:
        # v7x: 64 MiB VMEM per TensorCore; still want tm~512 if it fits.
        default_cap, tm_pref, th_align = 64 << 20, 512, 256
    else:
        default_cap, tm_pref, th_align = 64 << 20, 256, 128

    cap = vmem_cap if vmem_cap else default_cap
    # Leave ~20% headroom for compiler scratch; never hand the whole VMEM to
    # the pipeliner (double-buffered specs can overshoot a computed budget).
    budget = int(cap * 0.8)
    return {"budget": budget, "tm": tm_pref, "th_align": th_align}


def _vmem_bytes(tm, th, d_model):
    """Estimated VMEM working set (double-buffered in/out + f32 accumulator)."""
    bf2, f4 = 2, 4
    per_buf = (tm * d_model * bf2        # x tile (bf16)
               + d_model * th * bf2      # W1 slice (bf16)
               + th * f4                 # b1 (f32)
               + th * d_model * bf2      # W2 slice (bf16)
               + d_model * f4            # b2 (f32)
               + tm * d_model * bf2)     # bf16 output tile
    return 2 * per_buf + tm * d_model * f4


def _pick_hidden_tile(d_hidden, th):
    """Largest multiple of 128 that divides d_hidden and is <= requested th."""
    th = min(th, d_hidden)
    th -= th % 128
    th = max(th, 128)
    while d_hidden % th:
        th -= 128
    return th


def _select_tiles(d_model, d_hidden, profile, tm_req=None, th_req=None):
    """Pick (tm, th): largest tm (roofline) first, then largest th, under budget."""
    th_align = profile["th_align"]
    if d_hidden % th_align:
        th_align = 128
    th_cands = [t for t in range(d_hidden, th_align - 1, -th_align)
                if d_hidden % t == 0]
    if th_req is not None:
        th_req = _pick_hidden_tile(d_hidden, th_req)
        th_cands = [t for t in th_cands if t <= th_req] or [th_req]

    tm_pref = tm_req if tm_req is not None else profile["tm"]
    tm_cands = [t for t in (512, 384, 256, 128) if t <= tm_pref] or [tm_pref]

    for tm in tm_cands:
        for th in th_cands:
            if _vmem_bytes(tm, th, d_model) <= profile["budget"]:
                return tm, th
    return tm_cands[-1], th_cands[-1]


# ---------------------------------------------------------------------------
# Forward
# ---------------------------------------------------------------------------

def expert_forward(inp, fwd_expert_count, prepared, *, tm=None, th=None):
    """JAX/Pallas equivalent of _Expert.forward.

    inp              : (num_tokens, d_model) float32, tokens grouped by expert
    fwd_expert_count : host int array (num_expert,), contiguous segment lengths
    prepared         : output of prepare_expert_params (weights already laid out)
    tm, th           : optional tile-size hints (device-aware auto-pick otherwise)
    """
    counts = np.asarray(fwd_expert_count, dtype=np.int64)
    num_tokens, d_model = inp.shape
    assert int(counts.sum()) == num_tokens

    w1t, b1, w2t, b2 = prepared["w1t"], prepared["b1"], prepared["w2t"], prepared["b2"]
    num_expert, d_model_w, d_hidden = w1t.shape
    assert d_model_w == d_model
    assert d_model % 128 == 0 and d_hidden % 128 == 0, \
        "d_model/d_hidden must be multiples of 128 (TPU lane tiling)"

    if num_tokens == 0:
        return jnp.zeros((0, d_model), inp.dtype)

    profile = _device_profile()
    tm, th = _select_tiles(d_model, d_hidden, profile, tm_req=tm, th_req=th)

    # Per-expert padding to a multiple of tm (host-side index bookkeeping,
    # mirrors FMoE's CPU-side fwd_expert_count handling). Tiles of the same
    # expert stay contiguous -> weight/bias block indices change rarely.
    pad_counts = ((counts + tm - 1) // tm) * tm
    pad_offsets = np.zeros(num_expert, dtype=np.int64)
    pad_offsets[1:] = np.cumsum(pad_counts)[:-1]
    row_map = np.concatenate(
        [pad_offsets[e] + np.arange(counts[e]) for e in range(num_expert)]
    ).astype(np.int32)
    valid_tiles = int(pad_counts.sum()) // tm
    tile_eids = np.repeat(np.arange(num_expert), pad_counts // tm).astype(np.int32)

    # Capacity bucketing: round the tile count up to the next power of two so
    # the jitted pallas_call sees a bounded set of shapes across routing steps
    # (no per-step recompiles). Phantom tiles reuse the last expert id (their
    # weight block index doesn't change -> no extra weight DMA) and are skipped
    # inside the kernel via pl.when on the prefetched valid-tile count.
    bucket_tiles = 1 << max(0, (valid_tiles - 1).bit_length())
    pad_eid = tile_eids[-1] if valid_tiles > 0 else 0
    tile_eids = np.concatenate(
        [tile_eids, np.full(bucket_tiles - valid_tiles, pad_eid, dtype=np.int32)]
    ).astype(np.int32)
    padded_tokens = bucket_tiles * tm

    row_map_j = jnp.asarray(row_map)
    # Scatter real tokens into the padded, expert-grouped buffer (bf16 datapath).
    x_pad = jnp.zeros((padded_tokens, d_model), w1t.dtype).at[row_map_j].set(
        inp.astype(w1t.dtype))
    nvalid = jnp.asarray([valid_tiles], dtype=jnp.int32)

    out_pad = _expert_pallas(jnp.asarray(tile_eids), nvalid, x_pad,
                             w1t, b1, w2t, b2,
                             tm=tm, th=th, vmem_limit=profile["budget"])
    # Drop the padded rows (bf16 gather) and return in the caller's dtype.
    return out_pad[row_map_j].astype(inp.dtype)


def _reference(inp, counts, params):
    """Pure-JAX f32 reference mirroring FMoELinear segment semantics."""
    outs = []
    start = 0
    for e, c in enumerate(counts):
        c = int(c)
        seg = inp[start:start + c]
        h = seg @ params["w1"][e].T + params["b1"][e]
        h = _gelu_tanh(h)
        y = h @ params["w2"][e].T + params["b2"][e]
        outs.append(y)
        start += c
    return jnp.concatenate(outs, axis=0)


if __name__ == "__main__":
    num_expert, d_model, d_hidden = 4, 256, 512
    counts = np.array([8, 16, 0, 8], dtype=np.int64)   # fwd_expert_count (one empty expert)
    num_tokens = int(counts.sum())

    key = jax.random.PRNGKey(0)
    k_x, k_w1, k_b1, k_w2, k_b2 = jax.random.split(key, 5)
    inp = jax.random.normal(k_x, (num_tokens, d_model), dtype=jnp.float32)
    params = {
        # PyTorch FMoELinear layout: weight (num_expert, out_features, in_features)
        "w1": jax.random.normal(k_w1, (num_expert, d_hidden, d_model),
                                dtype=jnp.float32) * 0.02,
        "b1": jax.random.normal(k_b1, (num_expert, d_hidden), dtype=jnp.float32) * 0.02,
        "w2": jax.random.normal(k_w2, (num_expert, d_model, d_hidden),
                                dtype=jnp.float32) * 0.02,
        "b2": jax.random.normal(k_b2, (num_expert, d_model), dtype=jnp.float32) * 0.02,
    }

    prepared = prepare_expert_params(params)          # one-time layout/dtype prep
    # tm=256/th=256 exercises the hidden-reduction accumulator path (2 hidden
    # blocks) and the capacity-bucket / phantom-tile skip path at small shapes.
    out = expert_forward(inp, counts, prepared, tm=256, th=256)
    out = jax.block_until_ready(out)

    ref = _reference(inp, counts, params)
    # bf16 matmul datapath + bf16 kernel output vs f32 reference -> modest tolerance.
    np.testing.assert_allclose(np.asarray(out), np.asarray(ref), rtol=5e-2, atol=1e-2)
    print("KERNEL_OK")
</pallas_src>

<mosaic_0001>
module attributes {stable_mosaic.version = 11 : i64} {
  func.func @_expert_kernel(%arg0: i32, %arg1: i32, %arg2: memref<4xi32, #tpu.memory_space<smem>>, %arg3: memref<1xi32, #tpu.memory_space<smem>>, %arg4: memref<256x256xbf16, #tpu.memory_space<vmem>>, %arg5: memref<1x256x256xbf16, #tpu.memory_space<vmem>>, %arg6: memref<1x1x256xf32, #tpu.memory_space<vmem>>, %arg7: memref<1x256x256xbf16, #tpu.memory_space<vmem>>, %arg8: memref<1x1x256xf32, #tpu.memory_space<vmem>>, %arg9: memref<256x256xbf16, #tpu.memory_space<vmem>>, %arg10: memref<256x256xf32, #tpu.memory_space<vmem>>) attributes {dimension_semantics = [#tpu.dimension_semantics<parallel>, #tpu.dimension_semantics<arbitrary>], iteration_bounds = array<i64: 4, 2>, scalar_prefetch = 2 : i64, scratch_operands = 1 : i64, tpu.core_type = #tpu.core_type<tc>, window_params = [{transform_indices = @transform_0, window_bounds = array<i64: 256, 256>}, {transform_indices = @transform_1, window_bounds = array<i64: 1, 256, 256>}, {transform_indices = @transform_2, window_bounds = array<i64: 1, 1, 256>}, {transform_indices = @transform_3, window_bounds = array<i64: 1, 256, 256>}, {transform_indices = @transform_4, window_bounds = array<i64: 1, 1, 256>}, {transform_indices = @transform_5, window_bounds = array<i64: 256, 256>}]} {
    %c0 = arith.constant 0 : index
    %0 = memref.load %arg3[%c0] : memref<1xi32, #tpu.memory_space<smem>>
    %1 = arith.cmpi slt, %arg0, %0 : i32
    %2 = arith.extui %1 : i1 to i32
    %c0_i32 = arith.constant 0 : i32
    %3 = arith.cmpi ne, %2, %c0_i32 : i32
    scf.if %3 {
      %c0_i32_0 = arith.constant 0 : i32
      %4 = arith.cmpi eq, %arg1, %c0_i32_0 : i32
      %5 = arith.extui %4 : i1 to i32
      %c0_i32_1 = arith.constant 0 : i32
      %6 = arith.cmpi ne, %5, %c0_i32_1 : i32
      scf.if %6 {
        %c0_23 = arith.constant 0 : index
        %c0_24 = arith.constant 0 : index
        %c0_25 = arith.constant 0 : index
        %38 = vector.load %arg8[%c0_23, %c0_24, %c0_25] : memref<1x1x256xf32, #tpu.memory_space<vmem>>, vector<1x1x256xf32>
        %39 = vector.shape_cast %38 : vector<1x1x256xf32> to vector<1x256xf32>
        %40 = vector.shape_cast %39 : vector<1x256xf32> to vector<1x256xf32>
        %41 = vector.broadcast %40 : vector<1x256xf32> to vector<256x256xf32>
        %c0_26 = arith.constant 0 : index
        %c0_27 = arith.constant 0 : index
        %42 = vector.load %arg10[%c0_26, %c0_27] : memref<256x256xf32, #tpu.memory_space<vmem>>, vector<256x256xf32>
        tpu.vector_store %arg10[%c0_26, %c0_27], %41 {strides = array<i32>} : memref<256x256xf32, #tpu.memory_space<vmem>>, vector<256x256xf32>,
      } else {
      }
      %c0_2 = arith.constant 0 : index
      %c0_3 = arith.constant 0 : index
      %7 = vector.load %arg4[%c0_2, %c0_3] : memref<256x256xbf16, #tpu.memory_space<vmem>>, vector<256x256xbf16>
      %c0_4 = arith.constant 0 : index
      %c0_5 = arith.constant 0 : index
      %c0_6 = arith.constant 0 : index
      %8 = vector.load %arg5[%c0_4, %c0_5, %c0_6] : memref<1x256x256xbf16, #tpu.memory_space<vmem>>, vector<1x256x256xbf16>
      %9 = vector.shape_cast %8 : vector<1x256x256xbf16> to vector<256x256xbf16>
      %cst = arith.constant dense<0.000000e+00> : vector<256x256xf32>
      %10 = tpu.matmul %7, %9, %cst {dimension_numbers = #tpu.dot_dimension_numbers<[1], [0], [0], [1], [0, 0, 1, 1], [], []>} : vector<256x256xbf16>, vector<256x256xbf16>, vector<256x256xf32> -> vector<256x256xf32>
      %c0_7 = arith.constant 0 : index
      %c0_8 = arith.constant 0 : index
      %c0_9 = arith.constant 0 : index
      %11 = vector.load %arg6[%c0_7, %c0_8, %c0_9] : memref<1x1x256xf32, #tpu.memory_space<vmem>>, vector<1x1x256xf32>
      %12 = vector.shape_cast %11 : vector<1x1x256xf32> to vector<1x256xf32>
      %13 = vector.broadcast %12 : vector<1x256xf32> to vector<256x256xf32>
      %14 = arith.addf %10, %13 : vector<256x256xf32>
      %cst_10 = arith.constant 5.000000e-01 : f32
      %15 = vector.broadcast %cst_10 : f32 to vector<256x256xf32>
      %16 = arith.mulf %15, %14 : vector<256x256xf32>
      %cst_11 = arith.constant 4.471500e-02 : f32
      %17 = vector.broadcast %cst_11 : f32 to vector<256x256xf32>
      %18 = arith.mulf %17, %14 : vector<256x256xf32>
      %19 = arith.mulf %18, %14 : vector<256x256xf32>
      %20 = arith.mulf %19, %14 : vector<256x256xf32>
      %21 = arith.addf %14, %20 : vector<256x256xf32>
      %cst_12 = arith.constant 0.797884583 : f32
      %22 = vector.broadcast %cst_12 : f32 to vector<256x256xf32>
      %23 = arith.mulf %22, %21 : vector<256x256xf32>
      %24 = math.tanh %23 : vector<256x256xf32>
      %cst_13 = arith.constant 1.000000e+00 : f32
      %25 = vector.broadcast %cst_13 : f32 to vector<256x256xf32>
      %26 = arith.addf %25, %24 : vector<256x256xf32>
      %27 = arith.mulf %16, %26 : vector<256x256xf32>
      %c0_14 = arith.constant 0 : index
      %c0_15 = arith.constant 0 : index
      %28 = vector.load %arg10[%c0_14, %c0_15] : memref<256x256xf32, #tpu.memory_space<vmem>>, vector<256x256xf32>
      %29 = arith.truncf %27 : vector<256x256xf32> to vector<256x256xbf16>
      %c0_16 = arith.constant 0 : index
      %c0_17 = arith.constant 0 : index
      %c0_18 = arith.constant 0 : index
      %30 = vector.load %arg7[%c0_16, %c0_17, %c0_18] : memref<1x256x256xbf16, #tpu.memory_space<vmem>>, vector<1x256x256xbf16>
      %31 = vector.shape_cast %30 : vector<1x256x256xbf16> to vector<256x256xbf16>
      %cst_19 = arith.constant dense<0.000000e+00> : vector<256x256xf32>
      %32 = tpu.matmul %29, %31, %cst_19 {dimension_numbers = #tpu.dot_dimension_numbers<[1], [0], [0], [1], [0, 0, 1, 1], [], []>} : vector<256x256xbf16>, vector<256x256xbf16>, vector<256x256xf32> -> vector<256x256xf32>
      %33 = arith.addf %28, %32 : vector<256x256xf32>
      %c0_20 = arith.constant 0 : index
      %c0_21 = arith.constant 0 : index
      %34 = vector.load %arg10[%c0_20, %c0_21] : memref<256x256xf32, #tpu.memory_space<vmem>>, vector<256x256xf32>
      tpu.vector_store %arg10[%c0_20, %c0_21], %33 {strides = array<i32>} : memref<256x256xf32, #tpu.memory_space<vmem>>, vector<256x256xf32>,
      %c1_i32 = arith.constant 1 : i32
      %35 = arith.cmpi eq, %arg1, %c1_i32 : i32
      %36 = arith.extui %35 : i1 to i32
      %c0_i32_22 = arith.constant 0 : i32
      %37 = arith.cmpi ne, %36, %c0_i32_22 : i32
      scf.if %37 {
        %c0_23 = arith.constant 0 : index
        %c0_24 = arith.constant 0 : index
        %38 = vector.load %arg10[%c0_23, %c0_24] : memref<256x256xf32, #tpu.memory_space<vmem>>, vector<256x256xf32>
        %39 = arith.truncf %38 : vector<256x256xf32> to vector<256x256xbf16>
        %c0_25 = arith.constant 0 : index
        %c0_26 = arith.constant 0 : index
        %40 = vector.load %arg9[%c0_25, %c0_26] : memref<256x256xbf16, #tpu.memory_space<vmem>>, vector<256x256xbf16>
        tpu.vector_store %arg9[%c0_25, %c0_26], %39 {strides = array<i32>} : memref<256x256xbf16, #tpu.memory_space<vmem>>, vector<256x256xbf16>,
      } else {
      }
    } else {
    }
    return
  }
  func.func @transform_0(%arg0: i32, %arg1: i32, %arg2: memref<4xi32, #tpu.memory_space<smem>>, %arg3: memref<1xi32, #tpu.memory_space<smem>>) -> (i32, i32) {
    %c0_i32 = arith.constant 0 : i32
    %c0_i32_0 = arith.constant 0 : i32
    return %arg0, %c0_i32 : i32, i32
  }
  func.func @transform_1(%arg0: i32, %arg1: i32, %arg2: memref<4xi32, #tpu.memory_space<smem>>, %arg3: memref<1xi32, #tpu.memory_space<smem>>) -> (i32, i32, i32) {
    %0 = arith.index_cast %arg0 : i32 to index
    %1 = memref.load %arg2[%0] : memref<4xi32, #tpu.memory_space<smem>>
    %c0_i32 = arith.constant 0 : i32
    %c0_i32_0 = arith.constant 0 : i32
    return %1, %c0_i32, %arg1 : i32, i32, i32
  }
  func.func @transform_2(%arg0: i32, %arg1: i32, %arg2: memref<4xi32, #tpu.memory_space<smem>>, %arg3: memref<1xi32, #tpu.memory_space<smem>>) -> (i32, i32, i32) {
    %0 = arith.index_cast %arg0 : i32 to index
    %1 = memref.load %arg2[%0] : memref<4xi32, #tpu.memory_space<smem>>
    %c0_i32 = arith.constant 0 : i32
    %c0_i32_0 = arith.constant 0 : i32
    return %1, %c0_i32, %arg1 : i32, i32, i32
  }
  func.func @transform_3(%arg0: i32, %arg1: i32, %arg2: memref<4xi32, #tpu.memory_space<smem>>, %arg3: memref<1xi32, #tpu.memory_space<smem>>) -> (i32, i32, i32) {
    %0 = arith.index_cast %arg0 : i32 to index
    %1 = memref.load %arg2[%0] : memref<4xi32, #tpu.memory_space<smem>>
    %c0_i32 = arith.constant 0 : i32
    %c0_i32_0 = arith.constant 0 : i32
    return %1, %arg1, %c0_i32 : i32, i32, i32
  }
  func.func @transform_4(%arg0: i32, %arg1: i32, %arg2: memref<4xi32, #tpu.memory_space<smem>>, %arg3: memref<1xi32, #tpu.memory_space<smem>>) -> (i32, i32, i32) {
    %0 = arith.index_cast %arg0 : i32 to index
    %1 = memref.load %arg2[%0] : memref<4xi32, #tpu.memory_space<smem>>
    %c0_i32 = arith.constant 0 : i32
    %c0_i32_0 = arith.constant 0 : i32
    %c0_i32_1 = arith.constant 0 : i32
    return %1, %c0_i32, %c0_i32_0 : i32, i32, i32
  }
  func.func @transform_5(%arg0: i32, %arg1: i32, %arg2: memref<4xi32, #tpu.memory_space<smem>>, %arg3: memref<1xi32, #tpu.memory_space<smem>>) -> (i32, i32) {
    %c0_i32 = arith.constant 0 : i32
    %c0_i32_0 = arith.constant 0 : i32
    return %arg0, %c0_i32 : i32, i32
  }
}

</mosaic_0001>

<llo_original>
// kernel: _expert_pallas.1
$region0: #{_expert_pallas.1}
  #allocation0 [shape = 'u32[]', space=smem, size = 0x4, offset = 0x4, fixed_abs, tag = 'smem constant byte address 0x4 - core index']
  #allocation1 [shape = 'u32[144,128]{1,0:T(1,128)}', space=vmem, size = 0x12000, scoped, tag = 'internal scratch']
  #allocation2 [shape = 'f32[256,256]{1,0:T(8,128)}', space=vmem, size = 0x40000, scoped, tag = 'scratch operand']
  #allocation3 [shape = 's32[1]{0}', space=sflag, size = 0x4, scoped, tag = 'scoped memory for _expert_pallas.1']
  #allocation4 [shape = 'u8[512]{0}', space=smem, size = 0x200, scoped, tag = 'prefetched SMEM operand 0']
  #allocation5 [shape = 's32[1]{0:T(128)S(6)}', space=smem, size = 0x200, scoped, tag = 'prefetched SMEM operand 1']
  %s0 = inlined_call_operand.vmem [shape: s32[4], index: 0, kind: input, shape index: {}]
  %s1 = inlined_call_operand.<no memory space> [shape: s32[1], index: 1, kind: input, shape index: {}]
  %s2 = inlined_call_operand.hbm [shape: bf16[1024,256], index: 2, kind: input, shape index: {}]
  %s3 = inlined_call_operand.hbm [shape: bf16[4,256,512], index: 3, kind: input, shape index: {}]
  %s4 = inlined_call_operand.hbm [shape: f32[4,1,512], index: 4, kind: input, shape index: {}]
  %s5 = inlined_call_operand.hbm [shape: bf16[4,512,256], index: 5, kind: input, shape index: {}]
  %s6 = inlined_call_operand.vmem [shape: f32[4,1,256], index: 6, kind: input, shape index: {}]
  %s7 = inlined_call_operand.hbm [shape: bf16[1024,256], index: 7, kind: output, shape index: {}]
  %s8 = sld [smem:[#allocation0]]
  $region81: #{_expert_pallas.1} parent=0
    _
  %s10 = ssub.s32 1, %s8
  %s11 = scalar_select 0, %s10, %s8
  %s12 = sshll.u32 %s0, 4
  %s13 = int_to_ptr.vmem [resolvable:$true] %s12
  %15 = dma.vmem_to_smem %s13, 16, [#allocation4], [#allocation3]
  %16 = sst [smem:[#allocation5]] %s1
  %17 = dma.done [#allocation3], 16
  %18 = sfence
  $region1: #{_expert_pallas.1} parent=0
    #allocation6 [shape = 'u8[262144]{0}', space=vmem, size = 0x40000, scoped, tag = 'input window, operand 2']
    #allocation7 [shape = 's32[2]{0}', space=sflag, size = 0x8, scoped, tag = 'scoped memory for _expert_pallas.1']
    #allocation8 [shape = 's32[2]{0}', space=sflag, size = 0x8, scoped, tag = 'scoped memory for _expert_pallas.1']
    #allocation9 [shape = 'u8[262144]{0}', space=vmem, size = 0x40000, scoped, tag = 'input window, operand 3']
    #allocation10 [shape = 's32[2]{0}', space=sflag, size = 0x8, scoped, tag = 'scoped memory for _expert_pallas.1']
    #allocation11 [shape = 'u8[2048]{0}', space=vmem, size = 0x800, scoped, tag = 'input window, operand 4']
    #allocation12 [shape = 'u8[262144]{0}', space=vmem, size = 0x40000, scoped, tag = 'input window, operand 5']
    #allocation13 [shape = 's32[2]{0}', space=sflag, size = 0x8, scoped, tag = 'scoped memory for _expert_pallas.1']
    #allocation14 [shape = 'u8[262144]{0}', space=vmem, size = 0x40000, scoped, tag = 'output window, operand 0']
    %19 = vsyncpa [#allocation7], 0
    %s20 = scalar_lea.sflag [#allocation7], 1
    %21 = vsyncpa %s20, 0
    %22 = vsyncpa [#allocation10], 0
    %s23 = scalar_lea.sflag [#allocation10], 1
    %24 = vsyncpa %s23, 0
    %25 = vsyncpa [#allocation13], 0
    %s26 = scalar_lea.sflag [#allocation13], 1
    %27 = vsyncpa %s26, 0
    %28 = vsyncpa [#allocation8], 0
    %s29 = scalar_lea.sflag [#allocation8], 1
    %30 = vsyncpa %s29, 0
    loop: start=0, step=1, limit=10
    $region2: #{_expert_pallas.1} parent=1 // loop_pre_header
      _
    $region3: #{_expert_pallas.1} parent=1 // loop_header
      %s32 = sphi 0, %s36
      %p33 = scmp.ge.s32.totalorder %s32, 10
      %s39 = sphi 0, %s51
      %s40 = sphi 0, %s47
      %s41 = sphi 0, %s39
      %s42 = sphi 0, %s40
      %s43 = sphi 0, %s41
      %s44 = sphi 0, %s42
      %s54 = sphi 0, %s56
      %s57 = sphi 0, %s54
      %s58 = sphi 0, %s57
      %s74 = sphi 0, %s58
      %s84 = sphi 0, %s86
      %s87 = sphi 0, %s84
      %s88 = sphi 0, %s87
      %s104 = sphi 0, %s88
      %s114 = sphi 0, %s116
      %s117 = sphi 0, %s114
      %s118 = sphi 0, %s117
      %s134 = sphi 0, %s118
      %s144 = sphi 0, %s146
      %s147 = sphi 0, %s144
      %s148 = sphi 0, %s147
      %s164 = sphi 0, %s148
      %s172 = sphi 0, %s174
      %s175 = sphi 0, %s172
      %s176 = sphi 0, %s175
      %s192 = sphi 0, %s176
      %s198 = sphi 0, %s200
      %s201 = sphi 0, %s198
      %s202 = sphi 0, %s201
      %s218 = sphi 0, %s202
    $region4: #{_expert_pallas.1} parent=1 // loop_header_branch
      %35 = sbr.rel (%p33) target = $region8
    $region5: #{_expert_pallas.1} parent=1 // loop_body
      %s37 = ssub.s32 %s32, 1
      %s38 = ssub.s32 %s32, 2
      %s45 = sadd.s32 1, %s40
      %p46 = scmp.ge.s32.totalorder %s45, 2
      %s47 = scalar_select %p46, 0, %s45
      %s48 = sadd.s32 1, %s39
      %s49 = scalar_select %p46, %s48, %s39
      %p50 = scmp.ge.s32.totalorder %s49, 4
      %s51 = scalar_select %p50, 0, %s49
      %s52 = ssub.s32 %s39, %s51
      %p53 = scmp.eq.s32.totalorder %s52, 0
      %s55 = sadd.s32 %s54, 1
      %s56 = scalar_select %p53, %s54, %s55
      %p59 = pneg %p53
      %p60 = scmp.eq.s32.totalorder %s32, 7
      %p61 = por %p59, %p60
      %p62 = scmp.ne.s32.totalorder %s54, %s57
      %p63 = scmp.eq.s32.totalorder %s32, 0
      %p64 = por %p62, %p63
      %p65 = scmp.ne.s32.totalorder %s54, %s57
      %p66 = scmp.eq.s32.totalorder %s37, 7
      %p67 = por %p65, %p66
      %p68 = scmp.ne.s32.totalorder %s57, %s58
      %p69 = scmp.eq.s32.totalorder %s37, 0
      %p70 = por %p68, %p69
      %p71 = scmp.ne.s32.totalorder %s57, %s58
      %p72 = scmp.eq.s32.totalorder %s38, 7
      %p73 = por %p71, %p72
      %p75 = scmp.ne.s32.totalorder %s58, %s74
      %p76 = scmp.eq.s32.totalorder %s38, 0
      %p77 = por %p75, %p76
      %s78 = sld [smem:[#allocation4 + %s39]]
      %s79 = sld [smem:[#allocation4 + %s51]]
      %s80 = ssub.s32 %s78, %s79
      %s81 = ssub.s32 %s40, %s47
      %s82 = sor.u32 %s80, %s81
      %p83 = scmp.eq.s32.totalorder %s82, 0
      %s85 = sadd.s32 %s84, 1
      %s86 = scalar_select %p83, %s84, %s85
      %p89 = pneg %p83
      %p90 = scmp.eq.s32.totalorder %s32, 7
      %p91 = por %p89, %p90
      %p92 = scmp.ne.s32.totalorder %s84, %s87
      %p93 = scmp.eq.s32.totalorder %s32, 0
      %p94 = por %p92, %p93
      %p95 = scmp.ne.s32.totalorder %s84, %s87
      %p96 = scmp.eq.s32.totalorder %s37, 7
      %p97 = por %p95, %p96
      %p98 = scmp.ne.s32.totalorder %s87, %s88
      %p99 = scmp.eq.s32.totalorder %s37, 0
      %p100 = por %p98, %p99
      %p101 = scmp.ne.s32.totalorder %s87, %s88
      %p102 = scmp.eq.s32.totalorder %s38, 7
      %p103 = por %p101, %p102
      %p105 = scmp.ne.s32.totalorder %s88, %s104
      %p106 = scmp.eq.s32.totalorder %s38, 0
      %p107 = por %p105, %p106
      %s108 = sld [smem:[#allocation4 + %s39]]
      %s109 = sld [smem:[#allocation4 + %s51]]
      %s110 = ssub.s32 %s108, %s109
      %s111 = ssub.s32 %s40, %s47
      %s112 = sor.u32 %s110, %s111
      %p113 = scmp.eq.s32.totalorder %s112, 0
      %s115 = sadd.s32 %s114, 1
      %s116 = scalar_select %p113, %s114, %s115
      %p119 = pneg %p113
      %p120 = scmp.eq.s32.totalorder %s32, 7
      %p121 = por %p119, %p120
      %p122 = scmp.ne.s32.totalorder %s114, %s117
      %p123 = scmp.eq.s32.totalorder %s32, 0
      %p124 = por %p122, %p123
      %p125 = scmp.ne.s32.totalorder %s114, %s117
      %p126 = scmp.eq.s32.totalorder %s37, 7
      %p127 = por %p125, %p126
      %p128 = scmp.ne.s32.totalorder %s117, %s118
      %p129 = scmp.eq.s32.totalorder %s37, 0
      %p130 = por %p128, %p129
      %p131 = scmp.ne.s32.totalorder %s117, %s118
      %p132 = scmp.eq.s32.totalorder %s38, 7
      %p133 = por %p131, %p132
      %p135 = scmp.ne.s32.totalorder %s118, %s134
      %p136 = scmp.eq.s32.totalorder %s38, 0
      %p137 = por %p135, %p136
      %s138 = sld [smem:[#allocation4 + %s39]]
      %s139 = sld [smem:[#allocation4 + %s51]]
      %s140 = ssub.s32 %s138, %s139
      %s141 = ssub.s32 %s40, %s47
      %s142 = sor.u32 %s140, %s141
      %p143 = scmp.eq.s32.totalorder %s142, 0
      %s145 = sadd.s32 %s144, 1
      %s146 = scalar_select %p143, %s144, %s145
      %p149 = pneg %p143
      %p150 = scmp.eq.s32.totalorder %s32, 7
      %p151 = por %p149, %p150
      %p152 = scmp.ne.s32.totalorder %s144, %s147
      %p153 = scmp.eq.s32.totalorder %s32, 0
      %p154 = por %p152, %p153
      %p155 = scmp.ne.s32.totalorder %s144, %s147
      %p156 = scmp.eq.s32.totalorder %s37, 7
      %p157 = por %p155, %p156
      %p158 = scmp.ne.s32.totalorder %s147, %s148
      %p159 = scmp.eq.s32.totalorder %s37, 0
      %p160 = por %p158, %p159
      %p161 = scmp.ne.s32.totalorder %s147, %s148
      %p162 = scmp.eq.s32.totalorder %s38, 7
      %p163 = por %p161, %p162
      %p165 = scmp.ne.s32.totalorder %s148, %s164
      %p166 = scmp.eq.s32.totalorder %s38, 0
      %p167 = por %p165, %p166
      %s168 = sld [smem:[#allocation4 + %s39]]
      %s169 = sld [smem:[#allocation4 + %s51]]
      %s170 = ssub.s32 %s168, %s169
      %p171 = scmp.eq.s32.totalorder %s170, 0
      %s173 = sadd.s32 %s172, 1
      %s174 = scalar_select %p171, %s172, %s173
      %p177 = pneg %p171
      %p178 = scmp.eq.s32.totalorder %s32, 7
      %p179 = por %p177, %p178
      %p180 = scmp.ne.s32.totalorder %s172, %s175
      %p181 = scmp.eq.s32.totalorder %s32, 0
      %p182 = por %p180, %p181
      %p183 = scmp.ne.s32.totalorder %s172, %s175
      %p184 = scmp.eq.s32.totalorder %s37, 7
      %p185 = por %p183, %p184
      %p186 = scmp.ne.s32.totalorder %s175, %s176
      %p187 = scmp.eq.s32.totalorder %s37, 0
      %p188 = por %p186, %p187
      %p189 = scmp.ne.s32.totalorder %s175, %s176
      %p190 = scmp.eq.s32.totalorder %s38, 7
      %p191 = por %p189, %p190
      %p193 = scmp.ne.s32.totalorder %s176, %s192
      %p194 = scmp.eq.s32.totalorder %s38, 0
      %p195 = por %p193, %p194
      %s196 = ssub.s32 %s39, %s51
      %p197 = scmp.eq.s32.totalorder %s196, 0
      %s199 = sadd.s32 %s198, 1
      %s200 = scalar_select %p197, %s198, %s199
      %p203 = pneg %p197
      %p204 = scmp.eq.s32.totalorder %s32, 7
      %p205 = por %p203, %p204
      %p206 = scmp.ne.s32.totalorder %s198, %s201
      %p207 = scmp.eq.s32.totalorder %s32, 0
      %p208 = por %p206, %p207
      %p209 = scmp.ne.s32.totalorder %s198, %s201
      %p210 = scmp.eq.s32.totalorder %s37, 7
      %p211 = por %p209, %p210
      %p212 = scmp.ne.s32.totalorder %s201, %s202
      %p213 = scmp.eq.s32.totalorder %s37, 0
      %p214 = por %p212, %p213
      %p215 = scmp.ne.s32.totalorder %s201, %s202
      %p216 = scmp.eq.s32.totalorder %s38, 7
      %p217 = por %p215, %p216
      %p219 = scmp.ne.s32.totalorder %s202, %s218
      %p220 = scmp.eq.s32.totalorder %s38, 0
      %p221 = por %p219, %p220
      %p222 = scmp.le.s32.totalorder 1, %s32
      %p223 = scmp.lt.s32.totalorder %s32, 9
      %p224 = pnand %p222, %p223
      %p225 = pneg %p224
      // Predicated region
      $region9: #{_expert_pallas.1} parent=5 // pred_check
        _
      $region10: #{_expert_pallas.1} parent=5 // pred_check_branch
        %227 = sbr.rel (%p224) target = $region12
      $region11: #{_expert_pallas.1} parent=5 // pred_region
        %s228 = ssub.s32 %s32, 1
      $region12: #{_expert_pallas.1} parent=5 // pred_fallthru
        _
      %p229 = scmp.lt.s32.totalorder %s32, 8
      // Predicated region
      $region13: #{_expert_pallas.1} parent=5 // pred_check
        %p230 = pneg %p229
      $region14: #{_expert_pallas.1} parent=5 // pred_check_branch
        %232 = sbr.rel (%p230) target = $region16
      $region15: #{_expert_pallas.1} parent=5 // pred_region
        // Predicated region
        $region17: #{_expert_pallas.1} parent=15 // pred_check
          %p233 = pneg %p64
        $region18: #{_expert_pallas.1} parent=15 // pred_check_branch
          %235 = sbr.rel (%p233) target = $region20
        $region19: #{_expert_pallas.1} parent=15 // pred_region
          %s236 = sand.u32 %s54, 1
          %s237 = scalar_lea.sflag [#allocation7], %s236
          %s238 = sand.u32 %s54, 1
          %s239 = smul.addr %s238, 256
          %s240 = scalar_lea.vmem [#allocation6], %s239
          %s241 = smul.u32 32, %s39
          %s243 = ssub.s32 4096, 4096
          %244 = vsyncadd %s237, %s243
          %s245 = smul.addr %s241, 2
          %s246 = smul.addr %s245, 64
          %s247 = scalar_lea.hbm %s2, %s246
          %s248 = sshll.u32 %s240, 4
          %s249 = int_to_ptr.vmem [resolvable:$true] %s248
          %254 = dma.hbm_to_vmem [thread:$0]  %s247, 4096, %s249, %s237, 128, 128, 8
        $region20: #{_expert_pallas.1} parent=15 // pred_fallthru
          _
        // Predicated region
        $region21: #{_expert_pallas.1} parent=15 // pred_check
          %p255 = pneg %p94
        $region22: #{_expert_pallas.1} parent=15 // pred_check_branch
          %257 = sbr.rel (%p255) target = $region24
        $region23: #{_expert_pallas.1} parent=15 // pred_region
          %s258 = sand.u32 %s32, 1
          %s259 = scalar_lea.sflag [#allocation10], %s258
          %s260 = sand.u32 %s84, 1
          %s261 = smul.addr %s260, 256
          %s262 = scalar_lea.vmem [#allocation9], %s261
          %s263 = sld [smem:[#allocation4 + %s39]]
          %s264 = smul.u32 2, %s40
          %s266 = ssub.s32 4096, 4096
          %267 = vsyncadd %s259, %s266
          %s268 = smul.addr %s263, 128
          %s269 = sadd.s32 %s264, %s268
          %s270 = smul.addr %s269, 64
          %s271 = scalar_lea.hbm %s3, %s270
          %s272 = sshll.u32 %s262, 4
          %s273 = int_to_ptr.vmem [resolvable:$true] %s272
          %278 = dma.hbm_to_vmem [thread:$0]  %s271, 4096, %s273, %s259, 256, 128, 8
        $region24: #{_expert_pallas.1} parent=15 // pred_fallthru
          _
        // Predicated region
        $region25: #{_expert_pallas.1} parent=15 // pred_check
          %p279 = pneg %p124
        $region26: #{_expert_pallas.1} parent=15 // pred_check_branch
          %281 = sbr.rel (%p279) target = $region28
        $region27: #{_expert_pallas.1} parent=15 // pred_region
          %s282 = sand.u32 %s32, 1
          %s283 = scalar_lea.sflag [#allocation10], %s282
          %s284 = sand.u32 %s114, 1
          %s285 = smul.addr %s284, 2
          %s286 = scalar_lea.vmem [#allocation11], %s285
          %s287 = sld [smem:[#allocation4 + %s39]]
          %s288 = smul.u32 2, %s40
          %s290 = ssub.s32 32, 32
          %291 = vsyncadd %s283, %s290
          %s292 = smul.addr %s287, 4
          %s293 = sadd.s32 %s288, %s292
          %s294 = smul.addr %s293, 16
          %s295 = scalar_lea.hbm %s4, %s294
          %s297 = sshll.u32 %s286, 4
          %s298 = int_to_ptr.vmem [resolvable:$true] %s297
          %300 = dma.hbm_to_vmem [thread:$0]  %s295, 32, %s298, %s283
        $region28: #{_expert_pallas.1} parent=15 // pred_fallthru
          _
        // Predicated region
        $region29: #{_expert_pallas.1} parent=15 // pred_check
          %p301 = pneg %p154
        $region30: #{_expert_pallas.1} parent=15 // pred_check_branch
          %303 = sbr.rel (%p301) target = $region32
        $region31: #{_expert_pallas.1} parent=15 // pred_region
          %s304 = sand.u32 %s144, 1
          %s305 = scalar_lea.sflag [#allocation13], %s304
          %s306 = sand.u32 %s144, 1
          %s307 = smul.addr %s306, 256
          %s308 = scalar_lea.vmem [#allocation12], %s307
          %s309 = sld [smem:[#allocation4 + %s39]]
          %s310 = smul.u32 32, %s40
          %s312 = ssub.s32 4096, 4096
          %313 = vsyncadd %s305, %s312
          %s314 = smul.addr %s310, 2
          %s315 = smul.addr %s309, 128
          %s316 = sadd.s32 %s314, %s315
          %s317 = smul.addr %s316, 64
          %s318 = scalar_lea.hbm %s5, %s317
          %s319 = sshll.u32 %s308, 4
          %s320 = int_to_ptr.vmem [resolvable:$true] %s319
          %325 = dma.hbm_to_vmem [thread:$0]  %s318, 4096, %s320, %s305, 128, 128, 8
        $region32: #{_expert_pallas.1} parent=15 // pred_fallthru
          _
        // Predicated region
        $region33: #{_expert_pallas.1} parent=15 // pred_check
          %p326 = pneg %p182
        $region34: #{_expert_pallas.1} parent=15 // pred_check_branch
          %328 = sbr.rel (%p326) target = $region36
        $region35: #{_expert_pallas.1} parent=15 // pred_region
          %s329 = sld [smem:[#allocation4 + %s39]]
          %p330 = scmp.lt.s32.totalorder %s329, 3
          %s331 = scalar_select %p330, %s329, 3
          %s332 = smul.addr %s331, 2
          %s333 = scalar_lea.vmem %s6, %s332
          %s334 = sld [smem:[#allocation4 + %s39]]
        $region36: #{_expert_pallas.1} parent=15 // pred_fallthru
          _
      $region16: #{_expert_pallas.1} parent=5 // pred_fallthru
        _
      %p335 = scmp.le.s32.totalorder 1, %s32
      %p336 = scmp.lt.s32.totalorder %s32, 9
      %p337 = pnand %p335, %p336
      %p338 = pneg %p337
      // Predicated region
      $region37: #{_expert_pallas.1} parent=5 // pred_check
        _
      $region38: #{_expert_pallas.1} parent=5 // pred_check_branch
        %340 = sbr.rel (%p337) target = $region40
      $region39: #{_expert_pallas.1} parent=5 // pred_region
        %s341 = ssub.s32 %s32, 1
        %s342 = sand.u32 %s57, 1
        %s343 = scalar_lea.sflag [#allocation7], %s342
        %s344 = sand.u32 %s57, 1
        %s345 = smul.addr %s344, 256
        %s346 = scalar_lea.vmem [#allocation6], %s345
        // Predicated region
        $region41: #{_expert_pallas.1} parent=39 // pred_check
          %p347 = pneg %p70
        $region42: #{_expert_pallas.1} parent=39 // pred_check_branch
          %349 = sbr.rel (%p347) target = $region44
        $region43: #{_expert_pallas.1} parent=39 // pred_region
          %350 = dma.done %s343, 4096
        $region44: #{_expert_pallas.1} parent=39 // pred_fallthru
          _
        %s351 = sand.u32 %s37, 1
        %s352 = scalar_lea.sflag [#allocation10], %s351
        %s353 = sand.u32 %s87, 1
        %s354 = smul.addr %s353, 256
        %s355 = scalar_lea.vmem [#allocation9], %s354
        // Predicated region
        $region45: #{_expert_pallas.1} parent=39 // pred_check
          %p356 = pneg %p100
        $region46: #{_expert_pallas.1} parent=39 // pred_check_branch
          %358 = sbr.rel (%p356) target = $region48
        $region47: #{_expert_pallas.1} parent=39 // pred_region
          %359 = dma.done %s352, 4096
        $region48: #{_expert_pallas.1} parent=39 // pred_fallthru
          _
        %s360 = sand.u32 %s37, 1
        %s361 = scalar_lea.sflag [#allocation10], %s360
        %s362 = sand.u32 %s117, 1
        %s363 = smul.addr %s362, 2
        %s364 = scalar_lea.vmem [#allocation11], %s363
        // Predicated region
        $region49: #{_expert_pallas.1} parent=39 // pred_check
          %p365 = pneg %p130
        $region50: #{_expert_pallas.1} parent=39 // pred_check_branch
          %367 = sbr.rel (%p365) target = $region52
        $region51: #{_expert_pallas.1} parent=39 // pred_region
          %368 = dma.done %s361, 32
        $region52: #{_expert_pallas.1} parent=39 // pred_fallthru
          _
        %s369 = sand.u32 %s147, 1
        %s370 = scalar_lea.sflag [#allocation13], %s369
        %s371 = sand.u32 %s147, 1
        %s372 = smul.addr %s371, 256
        %s373 = scalar_lea.vmem [#allocation12], %s372
        // Predicated region
        $region53: #{_expert_pallas.1} parent=39 // pred_check
          %p374 = pneg %p160
        $region54: #{_expert_pallas.1} parent=39 // pred_check_branch
          %376 = sbr.rel (%p374) target = $region56
        $region55: #{_expert_pallas.1} parent=39 // pred_region
          %377 = dma.done %s370, 4096
        $region56: #{_expert_pallas.1} parent=39 // pred_fallthru
          _
        %s378 = sand.u32 %s57, 1
        %s379 = scalar_lea.sflag [#allocation7], %s378
        %s380 = sand.u32 %s57, 1
        %s381 = smul.addr %s380, 256
        %s382 = scalar_lea.vmem [#allocation6], %s381
        %p383 = pneg %p70
        %p384 = pneg %p67
        %s385 = sand.u32 %s37, 1
        %s386 = scalar_lea.sflag [#allocation10], %s385
        %s387 = sand.u32 %s87, 1
        %s388 = smul.addr %s387, 256
        %s389 = scalar_lea.vmem [#allocation9], %s388
        %p390 = pneg %p100
        %p391 = pneg %p97
        %s392 = sand.u32 %s37, 1
        %s393 = scalar_lea.sflag [#allocation10], %s392
        %s394 = sand.u32 %s117, 1
        %s395 = smul.addr %s394, 2
        %s396 = scalar_lea.vmem [#allocation11], %s395
        %p397 = pneg %p130
        %p398 = pneg %p127
        %s399 = sand.u32 %s147, 1
        %s400 = scalar_lea.sflag [#allocation13], %s399
        %s401 = sand.u32 %s147, 1
        %s402 = smul.addr %s401, 256
        %s403 = scalar_lea.vmem [#allocation12], %s402
        %p404 = pneg %p160
        %p405 = pneg %p157
        %s406 = sld [smem:[#allocation4 + %s41]]
        %p407 = scmp.lt.s32.totalorder %s406, 3
        %s408 = scalar_select %p407, %s406, 3
        %s409 = smul.addr %s408, 2
        %s410 = scalar_lea.vmem %s6, %s409
        %p411 = pneg %p188
        %p412 = pneg %p185
        %p413 = pneg %p214
        %p414 = pneg %p211
        %s415 = sand.u32 %s201, 1
        %s416 = scalar_lea.sflag [#allocation8], %s415
        %s417 = sand.u32 %s201, 1
        %s418 = smul.addr %s417, 256
        %s419 = scalar_lea.vmem [#allocation14], %s418
        %s420 = smul.u32 32, %s41
        %s421 = sld [smem:[#allocation4 + %s41]]
        %s422 = smul.u32 2, %s42
        %s423 = sld [smem:[#allocation4 + %s41]]
        %s424 = smul.u32 2, %s42
        %s425 = sld [smem:[#allocation4 + %s41]]
        %s426 = smul.u32 32, %s42
        %s427 = sld [smem:[#allocation4 + %s41]]
        %p428 = scmp.lt.s32.totalorder %s427, 3
        %s429 = scalar_select %p428, %s427, 3
        %s430 = smul.addr %s429, 2
        %s431 = scalar_lea.vmem %s6, %s430
        %s432 = sld [smem:[#allocation4 + %s41]]
        %s433 = smul.u32 32, %s41
        %s434 = sld [smem:[#allocation5]]
        %p435 = scmp.lt.s32.totalorder %s41, %s434
        // Predicated region
        $region57: #{_expert_pallas.1} parent=39 // pred_check
          %p436 = pneg %p435
        $region58: #{_expert_pallas.1} parent=39 // pred_check_branch
          %438 = sbr.rel (%p436) target = $region60
        $region59: #{_expert_pallas.1} parent=39 // pred_region
          %p439 = scmp.eq.s32.totalorder %s42, 0
          // Predicated region
          $region61: #{_expert_pallas.1} parent=59 // pred_check
            %p440 = pneg %p439
          $region62: #{_expert_pallas.1} parent=59 // pred_check_branch
            %442 = sbr.rel (%p440) target = $region64
          $region63: #{_expert_pallas.1} parent=59 // pred_region
            %v443 = vld [vmem:[%s431] sm:$0x3]
            %v445 = vlaneseq
            %v446 = vshrl.u32 %v445, 7
            %v447 = vsub.s32 0, %v446
            %v448 = vrot.slane %v443, %v447
            %v449 = vlaneseq
            %v450 = vshrl.u32 %v449, 7
            %v451 = vsub.s32 1, %v450
            %v452 = vrot.slane %v443, %v451
            %455 = vst [vmem:[#allocation2] sm:$0xff] %v448
            %456 = vst [vmem:[#allocation2 + $0x8] sm:$0xff] %v452
            %457 = vst [vmem:[#allocation2 + $0x10] sm:$0xff] %v448
            %458 = vst [vmem:[#allocation2 + $0x18] sm:$0xff] %v452
            %459 = vst [vmem:[#allocation2 + $0x20] sm:$0xff] %v448
            %460 = vst [vmem:[#allocation2 + $0x28] sm:$0xff] %v452
            %461 = vst [vmem:[#allocation2 + $0x30] sm:$0xff] %v448
            %462 = vst [vmem:[#allocation2 + $0x38] sm:$0xff] %v452
            %463 = vst [vmem:[#allocation2 + $0x40] sm:$0xff] %v448
            %464 = vst [vmem:[#allocation2 + $0x48] sm:$0xff] %v452
            %465 = vst [vmem:[#allocation2 + $0x50] sm:$0xff] %v448
            %466 = vst [vmem:[#allocation2 + $0x58] sm:$0xff] %v452
            %467 = vst [vmem:[#allocation2 + $0x60] sm:$0xff] %v448
            %468 = vst [vmem:[#allocation2 + $0x68] sm:$0xff] %v452
            %469 = vst [vmem:[#allocation2 + $0x70] sm:$0xff] %v448
            %470 = vst [vmem:[#allocation2 + $0x78] sm:$0xff] %v452
            %471 = vst [vmem:[#allocation2 + $0x80] sm:$0xff] %v448
            %472 = vst [vmem:[#allocation2 + $0x88] sm:$0xff] %v452
            %473 = vst [vmem:[#allocation2 + $0x90] sm:$0xff] %v448
            %474 = vst [vmem:[#allocation2 + $0x98] sm:$0xff] %v452
            %475 = vst [vmem:[#allocation2 + $0xa0] sm:$0xff] %v448
            %476 = vst [vmem:[#allocation2 + $0xa8] sm:$0xff] %v452
            %477 = vst [vmem:[#allocation2 + $0xb0] sm:$0xff] %v448
            %478 = vst [vmem:[#allocation2 + $0xb8] sm:$0xff] %v452
            %479 = vst [vmem:[#allocation2 + $0xc0] sm:$0xff] %v448
            %480 = vst [vmem:[#allocation2 + $0xc8] sm:$0xff] %v452
            %481 = vst [vmem:[#allocation2 + $0xd0] sm:$0xff] %v448
            %482 = vst [vmem:[#allocation2 + $0xd8] sm:$0xff] %v452
            %483 = vst [vmem:[#allocation2 + $0xe0] sm:$0xff] %v448
            %484 = vst [vmem:[#allocation2 + $0xe8] sm:$0xff] %v452
            %485 = vst [vmem:[#allocation2 + $0xf0] sm:$0xff] %v448
            %486 = vst [vmem:[#allocation2 + $0xf8] sm:$0xff] %v452
            %487 = vst [vmem:[#allocation2 + $0x100] sm:$0xff] %v448
            %488 = vst [vmem:[#allocation2 + $0x108] sm:$0xff] %v452
            %489 = vst [vmem:[#allocation2 + $0x110] sm:$0xff] %v448
            %490 = vst [vmem:[#allocation2 + $0x118] sm:$0xff] %v452
            %491 = vst [vmem:[#allocation2 + $0x120] sm:$0xff] %v448
            %492 = vst [vmem:[#allocation2 + $0x128] sm:$0xff] %v452
            %493 = vst [vmem:[#allocation2 + $0x130] sm:$0xff] %v448
            %494 = vst [vmem:[#allocation2 + $0x138] sm:$0xff] %v452
            %495 = vst [vmem:[#allocation2 + $0x140] sm:$0xff] %v448
            %496 = vst [vmem:[#allocation2 + $0x148] sm:$0xff] %v452
            %497 = vst [vmem:[#allocation2 + $0x150] sm:$0xff] %v448
            %498 = vst [vmem:[#allocation2 + $0x158] sm:$0xff] %v452
            %499 = vst [vmem:[#allocation2 + $0x160] sm:$0xff] %v448
            %500 = vst [vmem:[#allocation2 + $0x168] sm:$0xff] %v452
            %501 = vst [vmem:[#allocation2 + $0x170] sm:$0xff] %v448
            %502 = vst [vmem:[#allocation2 + $0x178] sm:$0xff] %v452
            %503 = vst [vmem:[#allocation2 + $0x180] sm:$0xff] %v448
            %504 = vst [vmem:[#allocation2 + $0x188] sm:$0xff] %v452
            %505 = vst [vmem:[#allocation2 + $0x190] sm:$0xff] %v448
            %506 = vst [vmem:[#allocation2 + $0x198] sm:$0xff] %v452
            %507 = vst [vmem:[#allocation2 + $0x1a0] sm:$0xff] %v448
            %508 = vst [vmem:[#allocation2 + $0x1a8] sm:$0xff] %v452
            %509 = vst [vmem:[#allocation2 + $0x1b0] sm:$0xff] %v448
            %510 = vst [vmem:[#allocation2 + $0x1b8] sm:$0xff] %v452
            %511 = vst [vmem:[#allocation2 + $0x1c0] sm:$0xff] %v448
            %512 = vst [vmem:[#allocation2 + $0x1c8] sm:$0xff] %v452
            %513 = vst [vmem:[#allocation2 + $0x1d0] sm:$0xff] %v448
            %514 = vst [vmem:[#allocation2 + $0x1d8] sm:$0xff] %v452
            %515 = vst [vmem:[#allocation2 + $0x1e0] sm:$0xff] %v448
            %516 = vst [vmem:[#allocation2 + $0x1e8] sm:$0xff] %v452
            %517 = vst [vmem:[#allocation2 + $0x1f0] sm:$0xff] %v448
            %518 = vst [vmem:[#allocation2 + $0x1f8] sm:$0xff] %v452
          $region64: #{_expert_pallas.1} parent=59 // pred_fallthru
            _
          %v519 = vld [vmem:[%s346] sm:$0xff]
          %v520 = vld [vmem:[%s346 + $0x8] sm:$0xff]
          %v521 = vld [vmem:[%s346 + $0x10] sm:$0xff]
          %v522 = vld [vmem:[%s346 + $0x18] sm:$0xff]
          %v523 = vld [vmem:[%s346 + $0x20] sm:$0xff]
          %v524 = vld [vmem:[%s346 + $0x28] sm:$0xff]
          %v525 = vld [vmem:[%s346 + $0x30] sm:$0xff]
          %v526 = vld [vmem:[%s346 + $0x38] sm:$0xff]
          %v527 = vld [vmem:[%s346 + $0x40] sm:$0xff]
          %v528 = vld [vmem:[%s346 + $0x48] sm:$0xff]
          %v529 = vld [vmem:[%s346 + $0x50] sm:$0xff]
          %v530 = vld [vmem:[%s346 + $0x58] sm:$0xff]
          %v531 = vld [vmem:[%s346 + $0x60] sm:$0xff]
          %v532 = vld [vmem:[%s346 + $0x68] sm:$0xff]
          %v533 = vld [vmem:[%s346 + $0x70] sm:$0xff]
          %v534 = vld [vmem:[%s346 + $0x78] sm:$0xff]
          %v535 = vld [vmem:[%s346 + $0x80] sm:$0xff]
          %v536 = vld [vmem:[%s346 + $0x88] sm:$0xff]
          %v537 = vld [vmem:[%s346 + $0x90] sm:$0xff]
          %v538 = vld [vmem:[%s346 + $0x98] sm:$0xff]
          %v539 = vld [vmem:[%s346 + $0xa0] sm:$0xff]
          %v540 = vld [vmem:[%s346 + $0xa8] sm:$0xff]
          %v541 = vld [vmem:[%s346 + $0xb0] sm:$0xff]
          %v542 = vld [vmem:[%s346 + $0xb8] sm:$0xff]
          %v543 = vld [vmem:[%s346 + $0xc0] sm:$0xff]
          %v544 = vld [vmem:[%s346 + $0xc8] sm:$0xff]
          %v545 = vld [vmem:[%s346 + $0xd0] sm:$0xff]
          %v546 = vld [vmem:[%s346 + $0xd8] sm:$0xff]
          %v547 = vld [vmem:[%s346 + $0xe0] sm:$0xff]
          %v548 = vld [vmem:[%s346 + $0xe8] sm:$0xff]
          %v549 = vld [vmem:[%s346 + $0xf0] sm:$0xff]
          %v550 = vld [vmem:[%s346 + $0xf8] sm:$0xff]
          %v551 = vld [vmem:[%s355] sm:$0xff]
          %v552 = vld [vmem:[%s355 + $0x8] sm:$0xff]
          %v553 = vld [vmem:[%s355 + $0x10] sm:$0xff]
          %v554 = vld [vmem:[%s355 + $0x18] sm:$0xff]
          %v555 = vld [vmem:[%s355 + $0x20] sm:$0xff]
          %v556 = vld [vmem:[%s355 + $0x28] sm:$0xff]
          %v557 = vld [vmem:[%s355 + $0x30] sm:$0xff]
          %v558 = vld [vmem:[%s355 + $0x38] sm:$0xff]
          %v559 = vld [vmem:[%s355 + $0x40] sm:$0xff]
          %v560 = vld [vmem:[%s355 + $0x48] sm:$0xff]
          %v561 = vld [vmem:[%s355 + $0x50] sm:$0xff]
          %v562 = vld [vmem:[%s355 + $0x58] sm:$0xff]
          %v563 = vld [vmem:[%s355 + $0x60] sm:$0xff]
          %v564 = vld [vmem:[%s355 + $0x68] sm:$0xff]
          %v565 = vld [vmem:[%s355 + $0x70] sm:$0xff]
          %v566 = vld [vmem:[%s355 + $0x78] sm:$0xff]
          %v567 = vld [vmem:[%s355 + $0x80] sm:$0xff]
          %v568 = vld [vmem:[%s355 + $0x88] sm:$0xff]
          %v569 = vld [vmem:[%s355 + $0x90] sm:$0xff]
          %v570 = vld [vmem:[%s355 + $0x98] sm:$0xff]
          %v571 = vld [vmem:[%s355 + $0xa0] sm:$0xff]
          %v572 = vld [vmem:[%s355 + $0xa8] sm:$0xff]
          %v573 = vld [vmem:[%s355 + $0xb0] sm:$0xff]
          %v574 = vld [vmem:[%s355 + $0xb8] sm:$0xff]
          %v575 = vld [vmem:[%s355 + $0xc0] sm:$0xff]
          %v576 = vld [vmem:[%s355 + $0xc8] sm:$0xff]
          %v577 = vld [vmem:[%s355 + $0xd0] sm:$0xff]
          %v578 = vld [vmem:[%s355 + $0xd8] sm:$0xff]
          %v579 = vld [vmem:[%s355 + $0xe0] sm:$0xff]
          %v580 = vld [vmem:[%s355 + $0xe8] sm:$0xff]
          %v581 = vld [vmem:[%s355 + $0xf0] sm:$0xff]
          %v582 = vld [vmem:[%s355 + $0xf8] sm:$0xff]
          %v583 = vld [vmem:[%s364] sm:$0x3]
          %v585 = vlaneseq
          %v586 = vshrl.u32 %v585, 7
          %v587 = vsub.s32 0, %v586
          %v588 = vrot.slane %v583, %v587
          %v589 = vlaneseq
          %v590 = vshrl.u32 %v589, 7
          %v591 = vsub.s32 1, %v590
          %v592 = vrot.slane %v583, %v591
          %v627 = vunpack.c.l.b16 %v519
          %v628 = vunpack.c.h.b16 %v519
          %v629 = vunpack.c.l.b16 %v520
          %v630 = vunpack.c.h.b16 %v520
          %v631 = vunpack.c.l.b16 %v521
          %v632 = vunpack.c.h.b16 %v521
          %v633 = vunpack.c.l.b16 %v522
          %v634 = vunpack.c.h.b16 %v522
          %v635 = vunpack.c.l.b16 %v523
          %v636 = vunpack.c.h.b16 %v523
          %v637 = vunpack.c.l.b16 %v524
          %v638 = vunpack.c.h.b16 %v524
          %v639 = vunpack.c.l.b16 %v525
          %v640 = vunpack.c.h.b16 %v525
          %v641 = vunpack.c.l.b16 %v526
          %v642 = vunpack.c.h.b16 %v526
          %v643 = vunpack.c.l.b16 %v527
          %v644 = vunpack.c.h.b16 %v527
          %v645 = vunpack.c.l.b16 %v528
          %v646 = vunpack.c.h.b16 %v528
          %v647 = vunpack.c.l.b16 %v529
          %v648 = vunpack.c.h.b16 %v529
          %v649 = vunpack.c.l.b16 %v530
          %v650 = vunpack.c.h.b16 %v530
          %v651 = vunpack.c.l.b16 %v531
          %v652 = vunpack.c.h.b16 %v531
          %v653 = vunpack.c.l.b16 %v532
          %v654 = vunpack.c.h.b16 %v532
          %v655 = vunpack.c.l.b16 %v533
          %v656 = vunpack.c.h.b16 %v533
          %v657 = vunpack.c.l.b16 %v534
          %v658 = vunpack.c.h.b16 %v534
          %v659 = vunpack.c.l.b16 %v535
          %v660 = vunpack.c.h.b16 %v535
          %v661 = vunpack.c.l.b16 %v536
          %v662 = vunpack.c.h.b16 %v536
          %v663 = vunpack.c.l.b16 %v537
          %v664 = vunpack.c.h.b16 %v537
          %v665 = vunpack.c.l.b16 %v538
          %v666 = vunpack.c.h.b16 %v538
          %v667 = vunpack.c.l.b16 %v539
          %v668 = vunpack.c.h.b16 %v539
          %v669 = vunpack.c.l.b16 %v540
          %v670 = vunpack.c.h.b16 %v540
          %v671 = vunpack.c.l.b16 %v541
          %v672 = vunpack.c.h.b16 %v541
          %v673 = vunpack.c.l.b16 %v542
          %v674 = vunpack.c.h.b16 %v542
          %v675 = vunpack.c.l.b16 %v543
          %v676 = vunpack.c.h.b16 %v543
          %v677 = vunpack.c.l.b16 %v544
          %v678 = vunpack.c.h.b16 %v544
          %v679 = vunpack.c.l.b16 %v545
          %v680 = vunpack.c.h.b16 %v545
          %v681 = vunpack.c.l.b16 %v546
          %v682 = vunpack.c.h.b16 %v546
          %v683 = vunpack.c.l.b16 %v547
          %v684 = vunpack.c.h.b16 %v547
          %v685 = vunpack.c.l.b16 %v548
          %v686 = vunpack.c.h.b16 %v548
          %v687 = vunpack.c.l.b16 %v549
          %v688 = vunpack.c.h.b16 %v549
          %v689 = vunpack.c.l.b16 %v550
          %v690 = vunpack.c.h.b16 %v550
          %v691 = vpack.c.b16 %v629, %v627
          %v692 = vpack.c.b16 %v630, %v628
          %v693 = vpack.c.b16 %v633, %v631
          %v694 = vpack.c.b16 %v634, %v632
          %v695 = vpack.c.b16 %v637, %v635
          %v696 = vpack.c.b16 %v638, %v636
          %v697 = vpack.c.b16 %v641, %v639
          %v698 = vpack.c.b16 %v642, %v640
          %v699 = vpack.c.b16 %v645, %v643
          %v700 = vpack.c.b16 %v646, %v644
          %v701 = vpack.c.b16 %v649, %v647
          %v702 = vpack.c.b16 %v650, %v648
          %v703 = vpack.c.b16 %v653, %v651
          %v704 = vpack.c.b16 %v654, %v652
          %v705 = vpack.c.b16 %v657, %v655
          %v706 = vpack.c.b16 %v658, %v656
          %v707 = vpack.c.b16 %v661, %v659
          %v708 = vpack.c.b16 %v662, %v660
          %v709 = vpack.c.b16 %v665, %v663
          %v710 = vpack.c.b16 %v666, %v664
          %v711 = vpack.c.b16 %v669, %v667
          %v712 = vpack.c.b16 %v670, %v668
          %v713 = vpack.c.b16 %v673, %v671
          %v714 = vpack.c.b16 %v674, %v672
          %v715 = vpack.c.b16 %v677, %v675
          %v716 = vpack.c.b16 %v678, %v676
          %v717 = vpack.c.b16 %v681, %v679
          %v718 = vpack.c.b16 %v682, %v680
          %v719 = vpack.c.b16 %v685, %v683
          %v720 = vpack.c.b16 %v686, %v684
          %v721 = vpack.c.b16 %v689, %v687
          %v722 = vpack.c.b16 %v690, %v688
          %v787 = vunpack.c.l.b16 %v551
          %v788 = vunpack.c.h.b16 %v551
          %v789 = vunpack.c.l.b16 %v552
          %v790 = vunpack.c.h.b16 %v552
          %v791 = vunpack.c.l.b16 %v553
          %v792 = vunpack.c.h.b16 %v553
          %v793 = vunpack.c.l.b16 %v554
          %v794 = vunpack.c.h.b16 %v554
          %v795 = vunpack.c.l.b16 %v555
          %v796 = vunpack.c.h.b16 %v555
          %v797 = vunpack.c.l.b16 %v556
          %v798 = vunpack.c.h.b16 %v556
          %v799 = vunpack.c.l.b16 %v557
          %v800 = vunpack.c.h.b16 %v557
          %v801 = vunpack.c.l.b16 %v558
          %v802 = vunpack.c.h.b16 %v558
          %v803 = vunpack.c.l.b16 %v559
          %v804 = vunpack.c.h.b16 %v559
          %v805 = vunpack.c.l.b16 %v560
          %v806 = vunpack.c.h.b16 %v560
          %v807 = vunpack.c.l.b16 %v561
          %v808 = vunpack.c.h.b16 %v561
          %v809 = vunpack.c.l.b16 %v562
          %v810 = vunpack.c.h.b16 %v562
          %v811 = vunpack.c.l.b16 %v563
          %v812 = vunpack.c.h.b16 %v563
          %v813 = vunpack.c.l.b16 %v564
          %v814 = vunpack.c.h.b16 %v564
          %v815 = vunpack.c.l.b16 %v565
          %v816 = vunpack.c.h.b16 %v565
          %v817 = vunpack.c.l.b16 %v566
          %v818 = vunpack.c.h.b16 %v566
          %v819 = vunpack.c.l.b16 %v567
          %v820 = vunpack.c.h.b16 %v567
          %v821 = vunpack.c.l.b16 %v568
          %v822 = vunpack.c.h.b16 %v568
          %v823 = vunpack.c.l.b16 %v569
          %v824 = vunpack.c.h.b16 %v569
          %v825 = vunpack.c.l.b16 %v570
          %v826 = vunpack.c.h.b16 %v570
          %v827 = vunpack.c.l.b16 %v571
          %v828 = vunpack.c.h.b16 %v571
          %v829 = vunpack.c.l.b16 %v572
          %v830 = vunpack.c.h.b16 %v572
          %v831 = vunpack.c.l.b16 %v573
          %v832 = vunpack.c.h.b16 %v573
          %v833 = vunpack.c.l.b16 %v574
          %v834 = vunpack.c.h.b16 %v574
          %v835 = vunpack.c.l.b16 %v575
          %v836 = vunpack.c.h.b16 %v575
          %v837 = vunpack.c.l.b16 %v576
          %v838 = vunpack.c.h.b16 %v576
          %v839 = vunpack.c.l.b16 %v577
          %v840 = vunpack.c.h.b16 %v577
          %v841 = vunpack.c.l.b16 %v578
          %v842 = vunpack.c.h.b16 %v578
          %v843 = vunpack.c.l.b16 %v579
          %v844 = vunpack.c.h.b16 %v579
          %v845 = vunpack.c.l.b16 %v580
          %v846 = vunpack.c.h.b16 %v580
          %v847 = vunpack.c.l.b16 %v581
          %v848 = vunpack.c.h.b16 %v581
          %v849 = vunpack.c.l.b16 %v582
          %v850 = vunpack.c.h.b16 %v582
          %v851 = vpack.c.b16 %v789, %v787
          %v852 = vpack.c.b16 %v790, %v788
          %v853 = vpack.c.b16 %v793, %v791
          %v854 = vpack.c.b16 %v794, %v792
          %v855 = vpack.c.b16 %v797, %v795
          %v856 = vpack.c.b16 %v798, %v796
          %v857 = vpack.c.b16 %v801, %v799
          %v858 = vpack.c.b16 %v802, %v800
          %v859 = vpack.c.b16 %v805, %v803
          %v860 = vpack.c.b16 %v806, %v804
          %v861 = vpack.c.b16 %v809, %v807
          %v862 = vpack.c.b16 %v810, %v808
          %v863 = vpack.c.b16 %v813, %v811
          %v864 = vpack.c.b16 %v814, %v812
          %v865 = vpack.c.b16 %v817, %v815
          %v866 = vpack.c.b16 %v818, %v816
          %v867 = vpack.c.b16 %v821, %v819
          %v868 = vpack.c.b16 %v822, %v820
          %v869 = vpack.c.b16 %v825, %v823
          %v870 = vpack.c.b16 %v826, %v824
          %v871 = vpack.c.b16 %v829, %v827
          %v872 = vpack.c.b16 %v830, %v828
          %v873 = vpack.c.b16 %v833, %v831
          %v874 = vpack.c.b16 %v834, %v832
          %v875 = vpack.c.b16 %v837, %v835
          %v876 = vpack.c.b16 %v838, %v836
          %v877 = vpack.c.b16 %v841, %v839
          %v878 = vpack.c.b16 %v842, %v840
          %v879 = vpack.c.b16 %v845, %v843
          %v880 = vpack.c.b16 %v846, %v844
          %v881 = vpack.c.b16 %v849, %v847
          %v882 = vpack.c.b16 %v850, %v848
          %915 = vmatprep.subr.bf16.mxu0 %v852
          %916 = vmatpush1.bf16.msra.mxu0 %v851
          %917 = vmatprep.subr.bf16.mxu0 %v854
          %918 = vmatpush1.bf16.msra.mxu0 %v853
          %919 = vmatprep.subr.bf16.mxu0 %v856
          %920 = vmatpush1.bf16.msra.mxu0 %v855
          %921 = vmatprep.subr.bf16.mxu0 %v858
          %922 = vmatpush1.bf16.msra.mxu0 %v857
          %923 = vmatprep.subr.bf16.mxu0 %v860
          %924 = vmatpush1.bf16.msra.mxu0 %v859
          %925 = vmatprep.subr.bf16.mxu0 %v862
          %926 = vmatpush1.bf16.msra.mxu0 %v861
          %927 = vmatprep.subr.bf16.mxu0 %v864
          %928 = vmatpush1.bf16.msra.mxu0 %v863
          %929 = vmatprep.subr.bf16.mxu0 %v866
          %930 = vmatpush1.bf16.msra.mxu0 %v865
          %931 = vmatprep.subr.bf16.mxu0 %v868
          %932 = vmatpush1.bf16.msra.mxu0 %v867
          %933 = vmatprep.subr.bf16.mxu0 %v870
          %934 = vmatpush1.bf16.msra.mxu0 %v869
          %935 = vmatprep.subr.bf16.mxu0 %v872
          %936 = vmatpush1.bf16.msra.mxu0 %v871
          %937 = vmatprep.subr.bf16.mxu0 %v874
          %938 = vmatpush1.bf16.msra.mxu0 %v873
          %939 = vmatprep.subr.bf16.mxu0 %v876
          %940 = vmatpush1.bf16.msra.mxu0 %v875
          %941 = vmatprep.subr.bf16.mxu0 %v878
          %942 = vmatpush1.bf16.msra.mxu0 %v877
          %943 = vmatprep.subr.bf16.mxu0 %v880
          %944 = vmatpush1.bf16.msra.mxu0 %v879
          %945 = vmatprep.subr.bf16.mxu0 %v882
          %946 = vmatpush1.bf16.msra.mxu0 %v881
          %947 = vmatprep.mubr.bf16.mxu0 %v692
          %948 = vmatmul.mubr.bf16.gmra.mrb[0].mxu0 %v691
          %v949 = vpop.f32.mrb[0].mxu0
          %v950 = vadd.f32 %v588, %v949
          %v951 = vpop.f32.mrb[0].mxu0
          %v952 = vadd.f32 %v592, %v951
          %v953 = vpop.f32.mrb[0].mxu0
          %v954 = vadd.f32 %v588, %v953
          %v955 = vpop.f32.mrb[0].mxu0
          %v956 = vadd.f32 %v592, %v955
          %957 = vmatprep.mubr.bf16.mxu0 %v694
          %958 = vmatmul.mubr.bf16.gmra.mrb[0].mxu0 %v693
          %v959 = vpop.f32.mrb[0].mxu0
          %v960 = vadd.f32 %v588, %v959
          %v961 = vpop.f32.mrb[0].mxu0
          %v962 = vadd.f32 %v592, %v961
          %v963 = vpop.f32.mrb[0].mxu0
          %v964 = vadd.f32 %v588, %v963
          %v965 = vpop.f32.mrb[0].mxu0
          %v966 = vadd.f32 %v592, %v965
          %967 = vmatprep.mubr.bf16.mxu0 %v696
          %968 = vmatmul.mubr.bf16.gmra.mrb[0].mxu0 %v695
          %v969 = vpop.f32.mrb[0].mxu0
          %v970 = vadd.f32 %v588, %v969
          %v971 = vpop.f32.mrb[0].mxu0
          %v972 = vadd.f32 %v592, %v971
          %v973 = vpop.f32.mrb[0].mxu0
          %v974 = vadd.f32 %v588, %v973
          %v975 = vpop.f32.mrb[0].mxu0
          %v976 = vadd.f32 %v592, %v975
          %977 = vmatprep.mubr.bf16.mxu0 %v698
          %978 = vmatmul.mubr.bf16.gmra.mrb[0].mxu0 %v697
          %v979 = vpop.f32.mrb[0].mxu0
          %v980 = vadd.f32 %v588, %v979
          %v981 = vpop.f32.mrb[0].mxu0
          %v982 = vadd.f32 %v592, %v981
          %v983 = vpop.f32.mrb[0].mxu0
          %v984 = vadd.f32 %v588, %v983
          %v985 = vpop.f32.mrb[0].mxu0
          %v986 = vadd.f32 %v592, %v985
          %987 = vmatprep.mubr.bf16.mxu0 %v700
          %988 = vmatmul.mubr.bf16.gmra.mrb[0].mxu0 %v699
          %v989 = vpop.f32.mrb[0].mxu0
          %v990 = vadd.f32 %v588, %v989
          %v991 = vpop.f32.mrb[0].mxu0
          %v992 = vadd.f32 %v592, %v991
          %v993 = vpop.f32.mrb[0].mxu0
          %v994 = vadd.f32 %v588, %v993
          %v995 = vpop.f32.mrb[0].mxu0
          %v996 = vadd.f32 %v592, %v995
          %997 = vmatprep.mubr.bf16.mxu0 %v702
          %998 = vmatmul.mubr.bf16.gmra.mrb[0].mxu0 %v701
          %v999 = vpop.f32.mrb[0].mxu0
          %v1000 = vadd.f32 %v588, %v999
          %v1001 = vpop.f32.mrb[0].mxu0
          %v1002 = vadd.f32 %v592, %v1001
          %v1003 = vpop.f32.mrb[0].mxu0
          %v1004 = vadd.f32 %v588, %v1003
          %v1005 = vpop.f32.mrb[0].mxu0
          %v1006 = vadd.f32 %v592, %v1005
          %1007 = vmatprep.mubr.bf16.mxu0 %v704
          %1008 = vmatmul.mubr.bf16.gmra.mrb[0].mxu0 %v703
          %v1009 = vpop.f32.mrb[0].mxu0
          %v1010 = vadd.f32 %v588, %v1009
          %v1011 = vpop.f32.mrb[0].mxu0
          %v1012 = vadd.f32 %v592, %v1011
          %v1013 = vpop.f32.mrb[0].mxu0
          %v1014 = vadd.f32 %v588, %v1013
          %v1015 = vpop.f32.mrb[0].mxu0
          %v1016 = vadd.f32 %v592, %v1015
          %1017 = vmatprep.mubr.bf16.mxu0 %v706
          %1018 = vmatmul.mubr.bf16.gmra.mrb[0].mxu0 %v705
          %v1019 = vpop.f32.mrb[0].mxu0
          %v1020 = vadd.f32 %v588, %v1019
          %v1021 = vpop.f32.mrb[0].mxu0
          %v1022 = vadd.f32 %v592, %v1021
          %v1023 = vpop.f32.mrb[0].mxu0
          %v1024 = vadd.f32 %v588, %v1023
          %v1025 = vpop.f32.mrb[0].mxu0
          %v1026 = vadd.f32 %v592, %v1025
          %1027 = vmatprep.mubr.bf16.mxu0 %v708
          %1028 = vmatmul.mubr.bf16.gmra.mrb[0].mxu0 %v707
          %v1029 = vpop.f32.mrb[0].mxu0
          %v1030 = vadd.f32 %v588, %v1029
          %v1031 = vpop.f32.mrb[0].mxu0
          %v1032 = vadd.f32 %v592, %v1031
          %v1033 = vpop.f32.mrb[0].mxu0
          %v1034 = vadd.f32 %v588, %v1033
          %v1035 = vpop.f32.mrb[0].mxu0
          %v1036 = vadd.f32 %v592, %v1035
          %1037 = vmatprep.mubr.bf16.mxu0 %v710
          %1038 = vmatmul.mubr.bf16.gmra.mrb[0].mxu0 %v709
          %v1039 = vpop.f32.mrb[0].mxu0
          %v1040 = vadd.f32 %v588, %v1039
          %v1041 = vpop.f32.mrb[0].mxu0
          %v1042 = vadd.f32 %v592, %v1041
          %v1043 = vpop.f32.mrb[0].mxu0
          %v1044 = vadd.f32 %v588, %v1043
          %v1045 = vpop.f32.mrb[0].mxu0
          %v1046 = vadd.f32 %v592, %v1045
          %1047 = vmatprep.mubr.bf16.mxu0 %v712
          %1048 = vmatmul.mubr.bf16.gmra.mrb[0].mxu0 %v711
          %v1049 = vpop.f32.mrb[0].mxu0
          %v1050 = vadd.f32 %v588, %v1049
          %v1051 = vpop.f32.mrb[0].mxu0
          %v1052 = vadd.f32 %v592, %v1051
          %v1053 = vpop.f32.mrb[0].mxu0
          %v1054 = vadd.f32 %v588, %v1053
          %v1055 = vpop.f32.mrb[0].mxu0
          %v1056 = vadd.f32 %v592, %v1055
          %1057 = vmatprep.mubr.bf16.mxu0 %v714
          %1058 = vmatmul.mubr.bf16.gmra.mrb[0].mxu0 %v713
          %v1059 = vpop.f32.mrb[0].mxu0
          %v1060 = vadd.f32 %v588, %v1059
          %v1061 = vpop.f32.mrb[0].mxu0
          %v1062 = vadd.f32 %v592, %v1061
          %v1063 = vpop.f32.mrb[0].mxu0
          %v1064 = vadd.f32 %v588, %v1063
          %v1065 = vpop.f32.mrb[0].mxu0
          %v1066 = vadd.f32 %v592, %v1065
          %1067 = vmatprep.mubr.bf16.mxu0 %v716
          %1068 = vmatmul.mubr.bf16.gmra.mrb[0].mxu0 %v715
          %v1069 = vpop.f32.mrb[0].mxu0
          %v1070 = vadd.f32 %v588, %v1069
          %v1071 = vpop.f32.mrb[0].mxu0
          %v1072 = vadd.f32 %v592, %v1071
          %v1073 = vpop.f32.mrb[0].mxu0
          %v1074 = vadd.f32 %v588, %v1073
          %v1075 = vpop.f32.mrb[0].mxu0
          %v1076 = vadd.f32 %v592, %v1075
          %1077 = vmatprep.mubr.bf16.mxu0 %v718
          %1078 = vmatmul.mubr.bf16.gmra.mrb[0].mxu0 %v717
          %v1079 = vpop.f32.mrb[0].mxu0
          %v1080 = vadd.f32 %v588, %v1079
          %v1081 = vpop.f32.mrb[0].mxu0
          %v1082 = vadd.f32 %v592, %v1081
          %v1083 = vpop.f32.mrb[0].mxu0
          %v1084 = vadd.f32 %v588, %v1083
          %v1085 = vpop.f32.mrb[0].mxu0
          %v1086 = vadd.f32 %v592, %v1085
          %1087 = vmatprep.mubr.bf16.mxu0 %v720
          %1088 = vmatmul.mubr.bf16.gmra.mrb[0].mxu0 %v719
          %v1089 = vpop.f32.mrb[0].mxu0
          %v1090 = vadd.f32 %v588, %v1089
          %v1091 = vpop.f32.mrb[0].mxu0
          %v1092 = vadd.f32 %v592, %v1091
          %v1093 = vpop.f32.mrb[0].mxu0
          %v1094 = vadd.f32 %v588, %v1093
          %v1095 = vpop.f32.mrb[0].mxu0
          %v1096 = vadd.f32 %v592, %v1095
          %1097 = vmatprep.mubr.bf16.mxu0 %v722
          %1098 = vmatmul.mubr.bf16.gmra.mrb[0].mxu0 %v721
          %v1099 = vpop.f32.mrb[0].mxu0
          %v1100 = vadd.f32 %v588, %v1099
          %v1101 = vpop.f32.mrb[0].mxu0
          %v1102 = vadd.f32 %v592, %v1101
          %v1103 = vpop.f32.mrb[0].mxu0
          %v1104 = vadd.f32 %v588, %v1103
          %v1105 = vpop.f32.mrb[0].mxu0
          %v1106 = vadd.f32 %v592, %v1105
          %1107 = vdwg.mxu0
          %v1108 = vmul.f32 %v950, 0.5
          %v1109 = vmul.f32 %v952, 0.5
          %v1110 = vmul.f32 %v954, 0.5
          %v1111 = vmul.f32 %v956, 0.5
          %v1112 = vmul.f32 %v960, 0.5
          %v1113 = vmul.f32 %v962, 0.5
          %v1114 = vmul.f32 %v964, 0.5
          %v1115 = vmul.f32 %v966, 0.5
          %v1116 = vmul.f32 %v970, 0.5
          %v1117 = vmul.f32 %v972, 0.5
          %v1118 = vmul.f32 %v974, 0.5
          %v1119 = vmul.f32 %v976, 0.5
          %v1120 = vmul.f32 %v980, 0.5
          %v1121 = vmul.f32 %v982, 0.5
          %v1122 = vmul.f32 %v984, 0.5
          %v1123 = vmul.f32 %v986, 0.5
          %v1124 = vmul.f32 %v990, 0.5
          %v1125 = vmul.f32 %v992, 0.5
          %v1126 = vmul.f32 %v994, 0.5
          %v1127 = vmul.f32 %v996, 0.5
          %v1128 = vmul.f32 %v1000, 0.5
          %v1129 = vmul.f32 %v1002, 0.5
          %v1130 = vmul.f32 %v1004, 0.5
          %v1131 = vmul.f32 %v1006, 0.5
          %v1132 = vmul.f32 %v1010, 0.5
          %v1133 = vmul.f32 %v1012, 0.5
          %v1134 = vmul.f32 %v1014, 0.5
          %v1135 = vmul.f32 %v1016, 0.5
          %v1136 = vmul.f32 %v1020, 0.5
          %v1137 = vmul.f32 %v1022, 0.5
          %v1138 = vmul.f32 %v1024, 0.5
          %v1139 = vmul.f32 %v1026, 0.5
          %v1140 = vmul.f32 %v1030, 0.5
          %v1141 = vmul.f32 %v1032, 0.5
          %v1142 = vmul.f32 %v1034, 0.5
          %v1143 = vmul.f32 %v1036, 0.5
          %v1144 = vmul.f32 %v1040, 0.5
          %v1145 = vmul.f32 %v1042, 0.5
          %v1146 = vmul.f32 %v1044, 0.5
          %v1147 = vmul.f32 %v1046, 0.5
          %v1148 = vmul.f32 %v1050, 0.5
          %v1149 = vmul.f32 %v1052, 0.5
          %v1150 = vmul.f32 %v1054, 0.5
          %v1151 = vmul.f32 %v1056, 0.5
          %v1152 = vmul.f32 %v1060, 0.5
          %v1153 = vmul.f32 %v1062, 0.5
          %v1154 = vmul.f32 %v1064, 0.5
          %v1155 = vmul.f32 %v1066, 0.5
          %v1156 = vmul.f32 %v1070, 0.5
          %v1157 = vmul.f32 %v1072, 0.5
          %v1158 = vmul.f32 %v1074, 0.5
          %v1159 = vmul.f32 %v1076, 0.5
          %v1160 = vmul.f32 %v1080, 0.5
          %v1161 = vmul.f32 %v1082, 0.5
          %v1162 = vmul.f32 %v1084, 0.5
          %v1163 = vmul.f32 %v1086, 0.5
          %v1164 = vmul.f32 %v1090, 0.5
          %v1165 = vmul.f32 %v1092, 0.5
          %v1166 = vmul.f32 %v1094, 0.5
          %v1167 = vmul.f32 %v1096, 0.5
          %v1168 = vmul.f32 %v1100, 0.5
          %v1169 = vmul.f32 %v1102, 0.5
          %v1170 = vmul.f32 %v1104, 0.5
          %v1171 = vmul.f32 %v1106, 0.5
          %v1172 = vmul.f32 %v950, 0.044715
          %v1173 = vmul.f32 %v952, 0.044715
          %v1174 = vmul.f32 %v954, 0.044715
          %v1175 = vmul.f32 %v956, 0.044715
          %v1176 = vmul.f32 %v960, 0.044715
          %v1177 = vmul.f32 %v962, 0.044715
          %v1178 = vmul.f32 %v964, 0.044715
          %v1179 = vmul.f32 %v966, 0.044715
          %v1180 = vmul.f32 %v970, 0.044715
          %v1181 = vmul.f32 %v972, 0.044715
          %v1182 = vmul.f32 %v974, 0.044715
          %v1183 = vmul.f32 %v976, 0.044715
          %v1184 = vmul.f32 %v980, 0.044715
          %v1185 = vmul.f32 %v982, 0.044715
          %v1186 = vmul.f32 %v984, 0.044715
          %v1187 = vmul.f32 %v986, 0.044715
          %v1188 = vmul.f32 %v990, 0.044715
          %v1189 = vmul.f32 %v992, 0.044715
          %v1190 = vmul.f32 %v994, 0.044715
          %v1191 = vmul.f32 %v996, 0.044715
          %v1192 = vmul.f32 %v1000, 0.044715
          %v1193 = vmul.f32 %v1002, 0.044715
          %v1194 = vmul.f32 %v1004, 0.044715
          %v1195 = vmul.f32 %v1006, 0.044715
          %v1196 = vmul.f32 %v1010, 0.044715
          %v1197 = vmul.f32 %v1012, 0.044715
          %v1198 = vmul.f32 %v1014, 0.044715
          %v1199 = vmul.f32 %v1016, 0.044715
          %v1200 = vmul.f32 %v1020, 0.044715
          %v1201 = vmul.f32 %v1022, 0.044715
          %v1202 = vmul.f32 %v1024, 0.044715
          %v1203 = vmul.f32 %v1026, 0.044715
          %v1204 = vmul.f32 %v1030, 0.044715
          %v1205 = vmul.f32 %v1032, 0.044715
          %v1206 = vmul.f32 %v1034, 0.044715
          %v1207 = vmul.f32 %v1036, 0.044715
          %v1208 = vmul.f32 %v1040, 0.044715
          %v1209 = vmul.f32 %v1042, 0.044715
          %v1210 = vmul.f32 %v1044, 0.044715
          %v1211 = vmul.f32 %v1046, 0.044715
          %v1212 = vmul.f32 %v1050, 0.044715
          %v1213 = vmul.f32 %v1052, 0.044715
          %v1214 = vmul.f32 %v1054, 0.044715
          %v1215 = vmul.f32 %v1056, 0.044715
          %v1216 = vmul.f32 %v1060, 0.044715
          %v1217 = vmul.f32 %v1062, 0.044715
          %v1218 = vmul.f32 %v1064, 0.044715
          %v1219 = vmul.f32 %v1066, 0.044715
          %v1220 = vmul.f32 %v1070, 0.044715
          %v1221 = vmul.f32 %v1072, 0.044715
          %v1222 = vmul.f32 %v1074, 0.044715
          %v1223 = vmul.f32 %v1076, 0.044715
          %v1224 = vmul.f32 %v1080, 0.044715
          %v1225 = vmul.f32 %v1082, 0.044715
          %v1226 = vmul.f32 %v1084, 0.044715
          %v1227 = vmul.f32 %v1086, 0.044715
          %v1228 = vmul.f32 %v1090, 0.044715
          %v1229 = vmul.f32 %v1092, 0.044715
          %v1230 = vmul.f32 %v1094, 0.044715
          %v1231 = vmul.f32 %v1096, 0.044715
          %v1232 = vmul.f32 %v1100, 0.044715
          %v1233 = vmul.f32 %v1102, 0.044715
          %v1234 = vmul.f32 %v1104, 0.044715
          %v1235 = vmul.f32 %v1106, 0.044715
          %v1236 = vmul.f32 %v1172, %v950
          %v1237 = vmul.f32 %v1173, %v952
          %v1238 = vmul.f32 %v1174, %v954
          %v1239 = vmul.f32 %v1175, %v956
          %v1240 = vmul.f32 %v1176, %v960
          %v1241 = vmul.f32 %v1177, %v962
          %v1242 = vmul.f32 %v1178, %v964
          %v1243 = vmul.f32 %v1179, %v966
          %v1244 = vmul.f32 %v1180, %v970
          %v1245 = vmul.f32 %v1181, %v972
          %v1246 = vmul.f32 %v1182, %v974
          %v1247 = vmul.f32 %v1183, %v976
          %v1248 = vmul.f32 %v1184, %v980
          %v1249 = vmul.f32 %v1185, %v982
          %v1250 = vmul.f32 %v1186, %v984
          %v1251 = vmul.f32 %v1187, %v986
          %v1252 = vmul.f32 %v1188, %v990
          %v1253 = vmul.f32 %v1189, %v992
          %v1254 = vmul.f32 %v1190, %v994
          %v1255 = vmul.f32 %v1191, %v996
          %v1256 = vmul.f32 %v1192, %v1000
          %v1257 = vmul.f32 %v1193, %v1002
          %v1258 = vmul.f32 %v1194, %v1004
          %v1259 = vmul.f32 %v1195, %v1006
          %v1260 = vmul.f32 %v1196, %v1010
          %v1261 = vmul.f32 %v1197, %v1012
          %v1262 = vmul.f32 %v1198, %v1014
          %v1263 = vmul.f32 %v1199, %v1016
          %v1264 = vmul.f32 %v1200, %v1020
          %v1265 = vmul.f32 %v1201, %v1022
          %v1266 = vmul.f32 %v1202, %v1024
          %v1267 = vmul.f32 %v1203, %v1026
          %v1268 = vmul.f32 %v1204, %v1030
          %v1269 = vmul.f32 %v1205, %v1032
          %v1270 = vmul.f32 %v1206, %v1034
          %v1271 = vmul.f32 %v1207, %v1036
          %v1272 = vmul.f32 %v1208, %v1040
          %v1273 = vmul.f32 %v1209, %v1042
          %v1274 = vmul.f32 %v1210, %v1044
          %v1275 = vmul.f32 %v1211, %v1046
          %v1276 = vmul.f32 %v1212, %v1050
          %v1277 = vmul.f32 %v1213, %v1052
          %v1278 = vmul.f32 %v1214, %v1054
          %v1279 = vmul.f32 %v1215, %v1056
          %v1280 = vmul.f32 %v1216, %v1060
          %v1281 = vmul.f32 %v1217, %v1062
          %v1282 = vmul.f32 %v1218, %v1064
          %v1283 = vmul.f32 %v1219, %v1066
          %v1284 = vmul.f32 %v1220, %v1070
          %v1285 = vmul.f32 %v1221, %v1072
          %v1286 = vmul.f32 %v1222, %v1074
          %v1287 = vmul.f32 %v1223, %v1076
          %v1288 = vmul.f32 %v1224, %v1080
          %v1289 = vmul.f32 %v1225, %v1082
          %v1290 = vmul.f32 %v1226, %v1084
          %v1291 = vmul.f32 %v1227, %v1086
          %v1292 = vmul.f32 %v1228, %v1090
          %v1293 = vmul.f32 %v1229, %v1092
          %v1294 = vmul.f32 %v1230, %v1094
          %v1295 = vmul.f32 %v1231, %v1096
          %v1296 = vmul.f32 %v1232, %v1100
          %v1297 = vmul.f32 %v1233, %v1102
          %v1298 = vmul.f32 %v1234, %v1104
          %v1299 = vmul.f32 %v1235, %v1106
          %v1300 = vmul.f32 %v1236, %v950
          %v1301 = vmul.f32 %v1237, %v952
          %v1302 = vmul.f32 %v1238, %v954
          %v1303 = vmul.f32 %v1239, %v956
          %v1304 = vmul.f32 %v1240, %v960
          %v1305 = vmul.f32 %v1241, %v962
          %v1306 = vmul.f32 %v1242, %v964
          %v1307 = vmul.f32 %v1243, %v966
          %v1308 = vmul.f32 %v1244, %v970
          %v1309 = vmul.f32 %v1245, %v972
          %v1310 = vmul.f32 %v1246, %v974
          %v1311 = vmul.f32 %v1247, %v976
          %v1312 = vmul.f32 %v1248, %v980
          %v1313 = vmul.f32 %v1249, %v982
          %v1314 = vmul.f32 %v1250, %v984
          %v1315 = vmul.f32 %v1251, %v986
          %v1316 = vmul.f32 %v1252, %v990
          %v1317 = vmul.f32 %v1253, %v992
          %v1318 = vmul.f32 %v1254, %v994
          %v1319 = vmul.f32 %v1255, %v996
          %v1320 = vmul.f32 %v1256, %v1000
          %v1321 = vmul.f32 %v1257, %v1002
          %v1322 = vmul.f32 %v1258, %v1004
          %v1323 = vmul.f32 %v1259, %v1006
          %v1324 = vmul.f32 %v1260, %v1010
          %v1325 = vmul.f32 %v1261, %v1012
          %v1326 = vmul.f32 %v1262, %v1014
          %v1327 = vmul.f32 %v1263, %v1016
          %v1328 = vmul.f32 %v1264, %v1020
          %v1329 = vmul.f32 %v1265, %v1022
          %v1330 = vmul.f32 %v1266, %v1024
          %v1331 = vmul.f32 %v1267, %v1026
          %v1332 = vmul.f32 %v1268, %v1030
          %v1333 = vmul.f32 %v1269, %v1032
          %v1334 = vmul.f32 %v1270, %v1034
          %v1335 = vmul.f32 %v1271, %v1036
          %v1336 = vmul.f32 %v1272, %v1040
          %v1337 = vmul.f32 %v1273, %v1042
          %v1338 = vmul.f32 %v1274, %v1044
          %v1339 = vmul.f32 %v1275, %v1046
          %v1340 = vmul.f32 %v1276, %v1050
          %v1341 = vmul.f32 %v1277, %v1052
          %v1342 = vmul.f32 %v1278, %v1054
          %v1343 = vmul.f32 %v1279, %v1056
          %v1344 = vmul.f32 %v1280, %v1060
          %v1345 = vmul.f32 %v1281, %v1062
          %v1346 = vmul.f32 %v1282, %v1064
          %v1347 = vmul.f32 %v1283, %v1066
          %v1348 = vmul.f32 %v1284, %v1070
          %v1349 = vmul.f32 %v1285, %v1072
          %v1350 = vmul.f32 %v1286, %v1074
          %v1351 = vmul.f32 %v1287, %v1076
          %v1352 = vmul.f32 %v1288, %v1080
          %v1353 = vmul.f32 %v1289, %v1082
          %v1354 = vmul.f32 %v1290, %v1084
          %v1355 = vmul.f32 %v1291, %v1086
          %v1356 = vmul.f32 %v1292, %v1090
          %v1357 = vmul.f32 %v1293, %v1092
          %v1358 = vmul.f32 %v1294, %v1094
          %v1359 = vmul.f32 %v1295, %v1096
          %v1360 = vmul.f32 %v1296, %v1100
          %v1361 = vmul.f32 %v1297, %v1102
          %v1362 = vmul.f32 %v1298, %v1104
          %v1363 = vmul.f32 %v1299, %v1106
          %v1364 = vadd.f32 %v950, %v1300
          %v1365 = vadd.f32 %v952, %v1301
          %v1366 = vadd.f32 %v954, %v1302
          %v1367 = vadd.f32 %v956, %v1303
          %v1368 = vadd.f32 %v960, %v1304
          %v1369 = vadd.f32 %v962, %v1305
          %v1370 = vadd.f32 %v964, %v1306
          %v1371 = vadd.f32 %v966, %v1307
          %v1372 = vadd.f32 %v970, %v1308
          %v1373 = vadd.f32 %v972, %v1309
          %v1374 = vadd.f32 %v974, %v1310
          %v1375 = vadd.f32 %v976, %v1311
          %v1376 = vadd.f32 %v980, %v1312
          %v1377 = vadd.f32 %v982, %v1313
          %v1378 = vadd.f32 %v984, %v1314
          %v1379 = vadd.f32 %v986, %v1315
          %v1380 = vadd.f32 %v990, %v1316
          %v1381 = vadd.f32 %v992, %v1317
          %v1382 = vadd.f32 %v994, %v1318
          %v1383 = vadd.f32 %v996, %v1319
          %v1384 = vadd.f32 %v1000, %v1320
          %v1385 = vadd.f32 %v1002, %v1321
          %v1386 = vadd.f32 %v1004, %v1322
          %v1387 = vadd.f32 %v1006, %v1323
          %v1388 = vadd.f32 %v1010, %v1324
          %v1389 = vadd.f32 %v1012, %v1325
          %v1390 = vadd.f32 %v1014, %v1326
          %v1391 = vadd.f32 %v1016, %v1327
          %v1392 = vadd.f32 %v1020, %v1328
          %v1393 = vadd.f32 %v1022, %v1329
          %v1394 = vadd.f32 %v1024, %v1330
          %v1395 = vadd.f32 %v1026, %v1331
          %v1396 = vadd.f32 %v1030, %v1332
          %v1397 = vadd.f32 %v1032, %v1333
          %v1398 = vadd.f32 %v1034, %v1334
          %v1399 = vadd.f32 %v1036, %v1335
          %v1400 = vadd.f32 %v1040, %v1336
          %v1401 = vadd.f32 %v1042, %v1337
          %v1402 = vadd.f32 %v1044, %v1338
          %v1403 = vadd.f32 %v1046, %v1339
          %v1404 = vadd.f32 %v1050, %v1340
          %v1405 = vadd.f32 %v1052, %v1341
          %v1406 = vadd.f32 %v1054, %v1342
          %v1407 = vadd.f32 %v1056, %v1343
          %v1408 = vadd.f32 %v1060, %v1344
          %v1409 = vadd.f32 %v1062, %v1345
          %v1410 = vadd.f32 %v1064, %v1346
          %v1411 = vadd.f32 %v1066, %v1347
          %v1412 = vadd.f32 %v1070, %v1348
          %v1413 = vadd.f32 %v1072, %v1349
          %v1414 = vadd.f32 %v1074, %v1350
          %v1415 = vadd.f32 %v1076, %v1351
          %v1416 = vadd.f32 %v1080, %v1352
          %v1417 = vadd.f32 %v1082, %v1353
          %v1418 = vadd.f32 %v1084, %v1354
          %v1419 = vadd.f32 %v1086, %v1355
          %v1420 = vadd.f32 %v1090, %v1356
          %v1421 = vadd.f32 %v1092, %v1357
          %v1422 = vadd.f32 %v1094, %v1358
          %v1423 = vadd.f32 %v1096, %v1359
          %v1424 = vadd.f32 %v1100, %v1360
          %v1425 = vadd.f32 %v1102, %v1361
          %v1426 = vadd.f32 %v1104, %v1362
          %v1427 = vadd.f32 %v1106, %v1363
          %v1428 = vmul.f32 %v1364, 0.7978846
          %v1429 = vmul.f32 %v1365, 0.7978846
          %v1430 = vmul.f32 %v1366, 0.7978846
          %v1431 = vmul.f32 %v1367, 0.7978846
          %v1432 = vmul.f32 %v1368, 0.7978846
          %v1433 = vmul.f32 %v1369, 0.7978846
          %v1434 = vmul.f32 %v1370, 0.7978846
          %v1435 = vmul.f32 %v1371, 0.7978846
          %v1436 = vmul.f32 %v1372, 0.7978846
          %v1437 = vmul.f32 %v1373, 0.7978846
          %v1438 = vmul.f32 %v1374, 0.7978846
          %v1439 = vmul.f32 %v1375, 0.7978846
          %v1440 = vmul.f32 %v1376, 0.7978846
          %v1441 = vmul.f32 %v1377, 0.7978846
          %v1442 = vmul.f32 %v1378, 0.7978846
          %v1443 = vmul.f32 %v1379, 0.7978846
          %v1444 = vmul.f32 %v1380, 0.7978846
          %v1445 = vmul.f32 %v1381, 0.7978846
          %v1446 = vmul.f32 %v1382, 0.7978846
          %v1447 = vmul.f32 %v1383, 0.7978846
          %v1448 = vmul.f32 %v1384, 0.7978846
          %v1449 = vmul.f32 %v1385, 0.7978846
          %v1450 = vmul.f32 %v1386, 0.7978846
          %v1451 = vmul.f32 %v1387, 0.7978846
          %v1452 = vmul.f32 %v1388, 0.7978846
          %v1453 = vmul.f32 %v1389, 0.7978846
          %v1454 = vmul.f32 %v1390, 0.7978846
          %v1455 = vmul.f32 %v1391, 0.7978846
          %v1456 = vmul.f32 %v1392, 0.7978846
          %v1457 = vmul.f32 %v1393, 0.7978846
          %v1458 = vmul.f32 %v1394, 0.7978846
          %v1459 = vmul.f32 %v1395, 0.7978846
          %v1460 = vmul.f32 %v1396, 0.7978846
          %v1461 = vmul.f32 %v1397, 0.7978846
          %v1462 = vmul.f32 %v1398, 0.7978846
          %v1463 = vmul.f32 %v1399, 0.7978846
          %v1464 = vmul.f32 %v1400, 0.7978846
          %v1465 = vmul.f32 %v1401, 0.7978846
          %v1466 = vmul.f32 %v1402, 0.7978846
          %v1467 = vmul.f32 %v1403, 0.7978846
          %v1468 = vmul.f32 %v1404, 0.7978846
          %v1469 = vmul.f32 %v1405, 0.7978846
          %v1470 = vmul.f32 %v1406, 0.7978846
          %v1471 = vmul.f32 %v1407, 0.7978846
          %v1472 = vmul.f32 %v1408, 0.7978846
          %v1473 = vmul.f32 %v1409, 0.7978846
          %v1474 = vmul.f32 %v1410, 0.7978846
          %v1475 = vmul.f32 %v1411, 0.7978846
          %v1476 = vmul.f32 %v1412, 0.7978846
          %v1477 = vmul.f32 %v1413, 0.7978846
          %v1478 = vmul.f32 %v1414, 0.7978846
          %v1479 = vmul.f32 %v1415, 0.7978846
          %v1480 = vmul.f32 %v1416, 0.7978846
          %v1481 = vmul.f32 %v1417, 0.7978846
          %v1482 = vmul.f32 %v1418, 0.7978846
          %v1483 = vmul.f32 %v1419, 0.7978846
          %v1484 = vmul.f32 %v1420, 0.7978846
          %v1485 = vmul.f32 %v1421, 0.7978846
          %v1486 = vmul.f32 %v1422, 0.7978846
          %v1487 = vmul.f32 %v1423, 0.7978846
          %v1488 = vmul.f32 %v1424, 0.7978846
          %v1489 = vmul.f32 %v1425, 0.7978846
          %v1490 = vmul.f32 %v1426, 0.7978846
          %v1491 = vmul.f32 %v1427, 0.7978846
          %v1492 = vtanh.pop %v1428
          %v1493 = vtanh.pop %v1429
          %v1494 = vtanh.pop %v1430
          %v1495 = vtanh.pop %v1431
          %v1496 = vtanh.pop %v1432
          %v1497 = vtanh.pop %v1433
          %v1498 = vtanh.pop %v1434
          %v1499 = vtanh.pop %v1435
          %v1500 = vtanh.pop %v1436
          %v1501 = vtanh.pop %v1437
          %v1502 = vtanh.pop %v1438
          %v1503 = vtanh.pop %v1439
          %v1504 = vtanh.pop %v1440
          %v1505 = vtanh.pop %v1441
          %v1506 = vtanh.pop %v1442
          %v1507 = vtanh.pop %v1443
          %v1508 = vtanh.pop %v1444
          %v1509 = vtanh.pop %v1445
          %v1510 = vtanh.pop %v1446
          %v1511 = vtanh.pop %v1447
          %v1512 = vtanh.pop %v1448
          %v1513 = vtanh.pop %v1449
          %v1514 = vtanh.pop %v1450
          %v1515 = vtanh.pop %v1451
          %v1516 = vtanh.pop %v1452
          %v1517 = vtanh.pop %v1453
          %v1518 = vtanh.pop %v1454
          %v1519 = vtanh.pop %v1455
          %v1520 = vtanh.pop %v1456
          %v1521 = vtanh.pop %v1457
          %v1522 = vtanh.pop %v1458
          %v1523 = vtanh.pop %v1459
          %v1524 = vtanh.pop %v1460
          %v1525 = vtanh.pop %v1461
          %v1526 = vtanh.pop %v1462
          %v1527 = vtanh.pop %v1463
          %v1528 = vtanh.pop %v1464
          %v1529 = vtanh.pop %v1465
          %v1530 = vtanh.pop %v1466
          %v1531 = vtanh.pop %v1467
          %v1532 = vtanh.pop %v1468
          %v1533 = vtanh.pop %v1469
          %v1534 = vtanh.pop %v1470
          %v1535 = vtanh.pop %v1471
          %v1536 = vtanh.pop %v1472
          %v1537 = vtanh.pop %v1473
          %v1538 = vtanh.pop %v1474
          %v1539 = vtanh.pop %v1475
          %v1540 = vtanh.pop %v1476
          %v1541 = vtanh.pop %v1477
          %v1542 = vtanh.pop %v1478
          %v1543 = vtanh.pop %v1479
          %v1544 = vtanh.pop %v1480
          %v1545 = vtanh.pop %v1481
          %v1546 = vtanh.pop %v1482
          %v1547 = vtanh.pop %v1483
          %v1548 = vtanh.pop %v1484
          %v1549 = vtanh.pop %v1485
          %v1550 = vtanh.pop %v1486
          %v1551 = vtanh.pop %v1487
          %v1552 = vtanh.pop %v1488
          %v1553 = vtanh.pop %v1489
          %v1554 = vtanh.pop %v1490
          %v1555 = vtanh.pop %v1491
          %v1556 = vadd.f32 %v1492, 1.0
          %v1557 = vadd.f32 %v1493, 1.0
          %v1558 = vadd.f32 %v1494, 1.0
          %v1559 = vadd.f32 %v1495, 1.0
          %v1560 = vadd.f32 %v1496, 1.0
          %v1561 = vadd.f32 %v1497, 1.0
          %v1562 = vadd.f32 %v1498, 1.0
          %v1563 = vadd.f32 %v1499, 1.0
          %v1564 = vadd.f32 %v1500, 1.0
          %v1565 = vadd.f32 %v1501, 1.0
          %v1566 = vadd.f32 %v1502, 1.0
          %v1567 = vadd.f32 %v1503, 1.0
          %v1568 = vadd.f32 %v1504, 1.0
          %v1569 = vadd.f32 %v1505, 1.0
          %v1570 = vadd.f32 %v1506, 1.0
          %v1571 = vadd.f32 %v1507, 1.0
          %v1572 = vadd.f32 %v1508, 1.0
          %v1573 = vadd.f32 %v1509, 1.0
          %v1574 = vadd.f32 %v1510, 1.0
          %v1575 = vadd.f32 %v1511, 1.0
          %v1576 = vadd.f32 %v1512, 1.0
          %v1577 = vadd.f32 %v1513, 1.0
          %v1578 = vadd.f32 %v1514, 1.0
          %v1579 = vadd.f32 %v1515, 1.0
          %v1580 = vadd.f32 %v1516, 1.0
          %v1581 = vadd.f32 %v1517, 1.0
          %v1582 = vadd.f32 %v1518, 1.0
          %v1583 = vadd.f32 %v1519, 1.0
          %v1584 = vadd.f32 %v1520, 1.0
          %v1585 = vadd.f32 %v1521, 1.0
          %v1586 = vadd.f32 %v1522, 1.0
          %v1587 = vadd.f32 %v1523, 1.0
          %v1588 = vadd.f32 %v1524, 1.0
          %v1589 = vadd.f32 %v1525, 1.0
          %v1590 = vadd.f32 %v1526, 1.0
          %v1591 = vadd.f32 %v1527, 1.0
          %v1592 = vadd.f32 %v1528, 1.0
          %v1593 = vadd.f32 %v1529, 1.0
          %v1594 = vadd.f32 %v1530, 1.0
          %v1595 = vadd.f32 %v1531, 1.0
          %v1596 = vadd.f32 %v1532, 1.0
          %v1597 = vadd.f32 %v1533, 1.0
          %v1598 = vadd.f32 %v1534, 1.0
          %v1599 = vadd.f32 %v1535, 1.0
          %v1600 = vadd.f32 %v1536, 1.0
          %v1601 = vadd.f32 %v1537, 1.0
          %v1602 = vadd.f32 %v1538, 1.0
          %v1603 = vadd.f32 %v1539, 1.0
          %v1604 = vadd.f32 %v1540, 1.0
          %v1605 = vadd.f32 %v1541, 1.0
          %v1606 = vadd.f32 %v1542, 1.0
          %v1607 = vadd.f32 %v1543, 1.0
          %v1608 = vadd.f32 %v1544, 1.0
          %v1609 = vadd.f32 %v1545, 1.0
          %v1610 = vadd.f32 %v1546, 1.0
          %v1611 = vadd.f32 %v1547, 1.0
          %v1612 = vadd.f32 %v1548, 1.0
          %v1613 = vadd.f32 %v1549, 1.0
          %v1614 = vadd.f32 %v1550, 1.0
          %v1615 = vadd.f32 %v1551, 1.0
          %v1616 = vadd.f32 %v1552, 1.0
          %v1617 = vadd.f32 %v1553, 1.0
          %v1618 = vadd.f32 %v1554, 1.0
          %v1619 = vadd.f32 %v1555, 1.0
          %v1620 = vmul.f32 %v1108, %v1556
          %v1621 = vmul.f32 %v1109, %v1557
          %v1622 = vmul.f32 %v1110, %v1558
          %v1623 = vmul.f32 %v1111, %v1559
          %v1624 = vmul.f32 %v1112, %v1560
          %v1625 = vmul.f32 %v1113, %v1561
          %v1626 = vmul.f32 %v1114, %v1562
          %v1627 = vmul.f32 %v1115, %v1563
          %v1628 = vmul.f32 %v1116, %v1564
          %v1629 = vmul.f32 %v1117, %v1565
          %v1630 = vmul.f32 %v1118, %v1566
          %v1631 = vmul.f32 %v1119, %v1567
          %v1632 = vmul.f32 %v1120, %v1568
          %v1633 = vmul.f32 %v1121, %v1569
          %v1634 = vmul.f32 %v1122, %v1570
          %v1635 = vmul.f32 %v1123, %v1571
          %v1636 = vmul.f32 %v1124, %v1572
          %v1637 = vmul.f32 %v1125, %v1573
          %v1638 = vmul.f32 %v1126, %v1574
          %v1639 = vmul.f32 %v1127, %v1575
          %v1640 = vmul.f32 %v1128, %v1576
          %v1641 = vmul.f32 %v1129, %v1577
          %v1642 = vmul.f32 %v1130, %v1578
          %v1643 = vmul.f32 %v1131, %v1579
          %v1644 = vmul.f32 %v1132, %v1580
          %v1645 = vmul.f32 %v1133, %v1581
          %v1646 = vmul.f32 %v1134, %v1582
          %v1647 = vmul.f32 %v1135, %v1583
          %v1648 = vmul.f32 %v1136, %v1584
          %v1649 = vmul.f32 %v1137, %v1585
          %v1650 = vmul.f32 %v1138, %v1586
          %v1651 = vmul.f32 %v1139, %v1587
          %v1652 = vmul.f32 %v1140, %v1588
          %v1653 = vmul.f32 %v1141, %v1589
          %v1654 = vmul.f32 %v1142, %v1590
          %v1655 = vmul.f32 %v1143, %v1591
          %v1656 = vmul.f32 %v1144, %v1592
          %v1657 = vmul.f32 %v1145, %v1593
          %v1658 = vmul.f32 %v1146, %v1594
          %v1659 = vmul.f32 %v1147, %v1595
          %v1660 = vmul.f32 %v1148, %v1596
          %v1661 = vmul.f32 %v1149, %v1597
          %v1662 = vmul.f32 %v1150, %v1598
          %v1663 = vmul.f32 %v1151, %v1599
          %v1664 = vmul.f32 %v1152, %v1600
          %v1665 = vmul.f32 %v1153, %v1601
          %v1666 = vmul.f32 %v1154, %v1602
          %v1667 = vmul.f32 %v1155, %v1603
          %v1668 = vmul.f32 %v1156, %v1604
          %v1669 = vmul.f32 %v1157, %v1605
          %v1670 = vmul.f32 %v1158, %v1606
          %v1671 = vmul.f32 %v1159, %v1607
          %v1672 = vmul.f32 %v1160, %v1608
          %v1673 = vmul.f32 %v1161, %v1609
          %v1674 = vmul.f32 %v1162, %v1610
          %v1675 = vmul.f32 %v1163, %v1611
          %v1676 = vmul.f32 %v1164, %v1612
          %v1677 = vmul.f32 %v1165, %v1613
          %v1678 = vmul.f32 %v1166, %v1614
          %v1679 = vmul.f32 %v1167, %v1615
          %v1680 = vmul.f32 %v1168, %v1616
          %v1681 = vmul.f32 %v1169, %v1617
          %v1682 = vmul.f32 %v1170, %v1618
          %v1683 = vmul.f32 %v1171, %v1619
          %v1684 = vld [vmem:[#allocation2] sm:$0xff]
          %v1685 = vld [vmem:[#allocation2 + $0x8] sm:$0xff]
          %v1686 = vld [vmem:[#allocation2 + $0x10] sm:$0xff]
          %v1687 = vld [vmem:[#allocation2 + $0x18] sm:$0xff]
          %v1688 = vld [vmem:[#allocation2 + $0x20] sm:$0xff]
          %v1689 = vld [vmem:[#allocation2 + $0x28] sm:$0xff]
          %v1690 = vld [vmem:[#allocation2 + $0x30] sm:$0xff]
          %v1691 = vld [vmem:[#allocation2 + $0x38] sm:$0xff]
          %v1692 = vld [vmem:[#allocation2 + $0x40] sm:$0xff]
          %v1693 = vld [vmem:[#allocation2 + $0x48] sm:$0xff]
          %v1694 = vld [vmem:[#allocation2 + $0x50] sm:$0xff]
          %v1695 = vld [vmem:[#allocation2 + $0x58] sm:$0xff]
          %v1696 = vld [vmem:[#allocation2 + $0x60] sm:$0xff]
          %v1697 = vld [vmem:[#allocation2 + $0x68] sm:$0xff]
          %v1698 = vld [vmem:[#allocation2 + $0x70] sm:$0xff]
          %v1699 = vld [vmem:[#allocation2 + $0x78] sm:$0xff]
          %v1700 = vld [vmem:[#allocation2 + $0x80] sm:$0xff]
          %v1701 = vld [vmem:[#allocation2 + $0x88] sm:$0xff]
          %v1702 = vld [vmem:[#allocation2 + $0x90] sm:$0xff]
          %v1703 = vld [vmem:[#allocation2 + $0x98] sm:$0xff]
          %v1704 = vld [vmem:[#allocation2 + $0xa0] sm:$0xff]
          %v1705 = vld [vmem:[#allocation2 + $0xa8] sm:$0xff]
          %v1706 = vld [vmem:[#allocation2 + $0xb0] sm:$0xff]
          %v1707 = vld [vmem:[#allocation2 + $0xb8] sm:$0xff]
          %v1708 = vld [vmem:[#allocation2 + $0xc0] sm:$0xff]
          %v1709 = vld [vmem:[#allocation2 + $0xc8] sm:$0xff]
          %v1710 = vld [vmem:[#allocation2 + $0xd0] sm:$0xff]
          %v1711 = vld [vmem:[#allocation2 + $0xd8] sm:$0xff]
          %v1712 = vld [vmem:[#allocation2 + $0xe0] sm:$0xff]
          %v1713 = vld [vmem:[#allocation2 + $0xe8] sm:$0xff]
          %v1714 = vld [vmem:[#allocation2 + $0xf0] sm:$0xff]
          %v1715 = vld [vmem:[#allocation2 + $0xf8] sm:$0xff]
          %v1716 = vld [vmem:[#allocation2 + $0x100] sm:$0xff]
          %v1717 = vld [vmem:[#allocation2 + $0x108] sm:$0xff]
          %v1718 = vld [vmem:[#allocation2 + $0x110] sm:$0xff]
          %v1719 = vld [vmem:[#allocation2 + $0x118] sm:$0xff]
          %v1720 = vld [vmem:[#allocation2 + $0x120] sm:$0xff]
          %v1721 = vld [vmem:[#allocation2 + $0x128] sm:$0xff]
          %v1722 = vld [vmem:[#allocation2 + $0x130] sm:$0xff]
          %v1723 = vld [vmem:[#allocation2 + $0x138] sm:$0xff]
          %v1724 = vld [vmem:[#allocation2 + $0x140] sm:$0xff]
          %v1725 = vld [vmem:[#allocation2 + $0x148] sm:$0xff]
          %v1726 = vld [vmem:[#allocation2 + $0x150] sm:$0xff]
          %v1727 = vld [vmem:[#allocation2 + $0x158] sm:$0xff]
          %v1728 = vld [vmem:[#allocation2 + $0x160] sm:$0xff]
          %v1729 = vld [vmem:[#allocation2 + $0x168] sm:$0xff]
          %v1730 = vld [vmem:[#allocation2 + $0x170] sm:$0xff]
          %v1731 = vld [vmem:[#allocation2 + $0x178] sm:$0xff]
          %v1732 = vld [vmem:[#allocation2 + $0x180] sm:$0xff]
          %v1733 = vld [vmem:[#allocation2 + $0x188] sm:$0xff]
          %v1734 = vld [vmem:[#allocation2 + $0x190] sm:$0xff]
          %v1735 = vld [vmem:[#allocation2 + $0x198] sm:$0xff]
          %v1736 = vld [vmem:[#allocation2 + $0x1a0] sm:$0xff]
          %v1737 = vld [vmem:[#allocation2 + $0x1a8] sm:$0xff]
          %v1738 = vld [vmem:[#allocation2 + $0x1b0] sm:$0xff]
          %v1739 = vld [vmem:[#allocation2 + $0x1b8] sm:$0xff]
          %v1740 = vld [vmem:[#allocation2 + $0x1c0] sm:$0xff]
          %v1741 = vld [vmem:[#allocation2 + $0x1c8] sm:$0xff]
          %v1742 = vld [vmem:[#allocation2 + $0x1d0] sm:$0xff]
          %v1743 = vld [vmem:[#allocation2 + $0x1d8] sm:$0xff]
          %v1744 = vld [vmem:[#allocation2 + $0x1e0] sm:$0xff]
          %v1745 = vld [vmem:[#allocation2 + $0x1e8] sm:$0xff]
          %v1746 = vld [vmem:[#allocation2 + $0x1f0] sm:$0xff]
          %v1747 = vld [vmem:[#allocation2 + $0x1f8] sm:$0xff]
          %v1748 = vpack.c.bf16 %v1622, %v1620
          %v1749 = vpack.c.bf16 %v1623, %v1621
          %v1750 = vpack.c.bf16 %v1626, %v1624
          %v1751 = vpack.c.bf16 %v1627, %v1625
          %v1752 = vpack.c.bf16 %v1630, %v1628
          %v1753 = vpack.c.bf16 %v1631, %v1629
          %v1754 = vpack.c.bf16 %v1634, %v1632
          %v1755 = vpack.c.bf16 %v1635, %v1633
          %v1756 = vpack.c.bf16 %v1638, %v1636
          %v1757 = vpack.c.bf16 %v1639, %v1637
          %v1758 = vpack.c.bf16 %v1642, %v1640
          %v1759 = vpack.c.bf16 %v1643, %v1641
          %v1760 = vpack.c.bf16 %v1646, %v1644
          %v1761 = vpack.c.bf16 %v1647, %v1645
          %v1762 = vpack.c.bf16 %v1650, %v1648
          %v1763 = vpack.c.bf16 %v1651, %v1649
          %v1764 = vpack.c.bf16 %v1654, %v1652
          %v1765 = vpack.c.bf16 %v1655, %v1653
          %v1766 = vpack.c.bf16 %v1658, %v1656
          %v1767 = vpack.c.bf16 %v1659, %v1657
          %v1768 = vpack.c.bf16 %v1662, %v1660
          %v1769 = vpack.c.bf16 %v1663, %v1661
          %v1770 = vpack.c.bf16 %v1666, %v1664
          %v1771 = vpack.c.bf16 %v1667, %v1665
          %v1772 = vpack.c.bf16 %v1670, %v1668
          %v1773 = vpack.c.bf16 %v1671, %v1669
          %v1774 = vpack.c.bf16 %v1674, %v1672
          %v1775 = vpack.c.bf16 %v1675, %v1673
          %v1776 = vpack.c.bf16 %v1678, %v1676
          %v1777 = vpack.c.bf16 %v1679, %v1677
          %v1778 = vpack.c.bf16 %v1682, %v1680
          %v1779 = vpack.c.bf16 %v1683, %v1681
          %v1780 = vld [vmem:[%s373] sm:$0xff]
          %v1781 = vld [vmem:[%s373 + $0x8] sm:$0xff]
          %v1782 = vld [vmem:[%s373 + $0x10] sm:$0xff]
          %v1783 = vld [vmem:[%s373 + $0x18] sm:$0xff]
          %v1784 = vld [vmem:[%s373 + $0x20] sm:$0xff]
          %v1785 = vld [vmem:[%s373 + $0x28] sm:$0xff]
          %v1786 = vld [vmem:[%s373 + $0x30] sm:$0xff]
          %v1787 = vld [vmem:[%s373 + $0x38] sm:$0xff]
          %v1788 = vld [vmem:[%s373 + $0x40] sm:$0xff]
          %v1789 = vld [vmem:[%s373 + $0x48] sm:$0xff]
          %v1790 = vld [vmem:[%s373 + $0x50] sm:$0xff]
          %v1791 = vld [vmem:[%s373 + $0x58] sm:$0xff]
          %v1792 = vld [vmem:[%s373 + $0x60] sm:$0xff]
          %v1793 = vld [vmem:[%s373 + $0x68] sm:$0xff]
          %v1794 = vld [vmem:[%s373 + $0x70] sm:$0xff]
          %v1795 = vld [vmem:[%s373 + $0x78] sm:$0xff]
          %v1796 = vld [vmem:[%s373 + $0x80] sm:$0xff]
          %v1797 = vld [vmem:[%s373 + $0x88] sm:$0xff]
          %v1798 = vld [vmem:[%s373 + $0x90] sm:$0xff]
          %v1799 = vld [vmem:[%s373 + $0x98] sm:$0xff]
          %v1800 = vld [vmem:[%s373 + $0xa0] sm:$0xff]
          %v1801 = vld [vmem:[%s373 + $0xa8] sm:$0xff]
          %v1802 = vld [vmem:[%s373 + $0xb0] sm:$0xff]
          %v1803 = vld [vmem:[%s373 + $0xb8] sm:$0xff]
          %v1804 = vld [vmem:[%s373 + $0xc0] sm:$0xff]
          %v1805 = vld [vmem:[%s373 + $0xc8] sm:$0xff]
          %v1806 = vld [vmem:[%s373 + $0xd0] sm:$0xff]
          %v1807 = vld [vmem:[%s373 + $0xd8] sm:$0xff]
          %v1808 = vld [vmem:[%s373 + $0xe0] sm:$0xff]
          %v1809 = vld [vmem:[%s373 + $0xe8] sm:$0xff]
          %v1810 = vld [vmem:[%s373 + $0xf0] sm:$0xff]
          %v1811 = vld [vmem:[%s373 + $0xf8] sm:$0xff]
          %v1844 = vunpack.c.l.b16 %v1780
          %v1845 = vunpack.c.h.b16 %v1780
          %v1846 = vunpack.c.l.b16 %v1781
          %v1847 = vunpack.c.h.b16 %v1781
          %v1848 = vunpack.c.l.b16 %v1782
          %v1849 = vunpack.c.h.b16 %v1782
          %v1850 = vunpack.c.l.b16 %v1783
          %v1851 = vunpack.c.h.b16 %v1783
          %v1852 = vunpack.c.l.b16 %v1784
          %v1853 = vunpack.c.h.b16 %v1784
          %v1854 = vunpack.c.l.b16 %v1785
          %v1855 = vunpack.c.h.b16 %v1785
          %v1856 = vunpack.c.l.b16 %v1786
          %v1857 = vunpack.c.h.b16 %v1786
          %v1858 = vunpack.c.l.b16 %v1787
          %v1859 = vunpack.c.h.b16 %v1787
          %v1860 = vunpack.c.l.b16 %v1788
          %v1861 = vunpack.c.h.b16 %v1788
          %v1862 = vunpack.c.l.b16 %v1789
          %v1863 = vunpack.c.h.b16 %v1789
          %v1864 = vunpack.c.l.b16 %v1790
          %v1865 = vunpack.c.h.b16 %v1790
          %v1866 = vunpack.c.l.b16 %v1791
          %v1867 = vunpack.c.h.b16 %v1791
          %v1868 = vunpack.c.l.b16 %v1792
          %v1869 = vunpack.c.h.b16 %v1792
          %v1870 = vunpack.c.l.b16 %v1793
          %v1871 = vunpack.c.h.b16 %v1793
          %v1872 = vunpack.c.l.b16 %v1794
          %v1873 = vunpack.c.h.b16 %v1794
          %v1874 = vunpack.c.l.b16 %v1795
          %v1875 = vunpack.c.h.b16 %v1795
          %v1876 = vunpack.c.l.b16 %v1796
          %v1877 = vunpack.c.h.b16 %v1796
          %v1878 = vunpack.c.l.b16 %v1797
          %v1879 = vunpack.c.h.b16 %v1797
          %v1880 = vunpack.c.l.b16 %v1798
          %v1881 = vunpack.c.h.b16 %v1798
          %v1882 = vunpack.c.l.b16 %v1799
          %v1883 = vunpack.c.h.b16 %v1799
          %v1884 = vunpack.c.l.b16 %v1800
          %v1885 = vunpack.c.h.b16 %v1800
          %v1886 = vunpack.c.l.b16 %v1801
          %v1887 = vunpack.c.h.b16 %v1801
          %v1888 = vunpack.c.l.b16 %v1802
          %v1889 = vunpack.c.h.b16 %v1802
          %v1890 = vunpack.c.l.b16 %v1803
          %v1891 = vunpack.c.h.b16 %v1803
          %v1892 = vunpack.c.l.b16 %v1804
          %v1893 = vunpack.c.h.b16 %v1804
          %v1894 = vunpack.c.l.b16 %v1805
          %v1895 = vunpack.c.h.b16 %v1805
          %v1896 = vunpack.c.l.b16 %v1806
          %v1897 = vunpack.c.h.b16 %v1806
          %v1898 = vunpack.c.l.b16 %v1807
          %v1899 = vunpack.c.h.b16 %v1807
          %v1900 = vunpack.c.l.b16 %v1808
          %v1901 = vunpack.c.h.b16 %v1808
          %v1902 = vunpack.c.l.b16 %v1809
          %v1903 = vunpack.c.h.b16 %v1809
          %v1904 = vunpack.c.l.b16 %v1810
          %v1905 = vunpack.c.h.b16 %v1810
          %v1906 = vunpack.c.l.b16 %v1811
          %v1907 = vunpack.c.h.b16 %v1811
          %v1908 = vpack.c.b16 %v1846, %v1844
          %v1909 = vpack.c.b16 %v1847, %v1845
          %v1910 = vpack.c.b16 %v1850, %v1848
          %v1911 = vpack.c.b16 %v1851, %v1849
          %v1912 = vpack.c.b16 %v1854, %v1852
          %v1913 = vpack.c.b16 %v1855, %v1853
          %v1914 = vpack.c.b16 %v1858, %v1856
          %v1915 = vpack.c.b16 %v1859, %v1857
          %v1916 = vpack.c.b16 %v1862, %v1860
          %v1917 = vpack.c.b16 %v1863, %v1861
          %v1918 = vpack.c.b16 %v1866, %v1864
          %v1919 = vpack.c.b16 %v1867, %v1865
          %v1920 = vpack.c.b16 %v1870, %v1868
          %v1921 = vpack.c.b16 %v1871, %v1869
          %v1922 = vpack.c.b16 %v1874, %v1872
          %v1923 = vpack.c.b16 %v1875, %v1873
          %v1924 = vpack.c.b16 %v1878, %v1876
          %v1925 = vpack.c.b16 %v1879, %v1877
          %v1926 = vpack.c.b16 %v1882, %v1880
          %v1927 = vpack.c.b16 %v1883, %v1881
          %v1928 = vpack.c.b16 %v1886, %v1884
          %v1929 = vpack.c.b16 %v1887, %v1885
          %v1930 = vpack.c.b16 %v1890, %v1888
          %v1931 = vpack.c.b16 %v1891, %v1889
          %v1932 = vpack.c.b16 %v1894, %v1892
          %v1933 = vpack.c.b16 %v1895, %v1893
          %v1934 = vpack.c.b16 %v1898, %v1896
          %v1935 = vpack.c.b16 %v1899, %v1897
          %v1936 = vpack.c.b16 %v1902, %v1900
          %v1937 = vpack.c.b16 %v1903, %v1901
          %v1938 = vpack.c.b16 %v1906, %v1904
          %v1939 = vpack.c.b16 %v1907, %v1905
          %1972 = vmatprep.subr.bf16.mxu0 %v1909
          %1973 = vmatpush1.bf16.msra.mxu0 %v1908
          %1974 = vmatprep.subr.bf16.mxu0 %v1911
          %1975 = vmatpush1.bf16.msra.mxu0 %v1910
          %1976 = vmatprep.subr.bf16.mxu0 %v1913
          %1977 = vmatpush1.bf16.msra.mxu0 %v1912
          %1978 = vmatprep.subr.bf16.mxu0 %v1915
          %1979 = vmatpush1.bf16.msra.mxu0 %v1914
          %1980 = vmatprep.subr.bf16.mxu0 %v1917
          %1981 = vmatpush1.bf16.msra.mxu0 %v1916
          %1982 = vmatprep.subr.bf16.mxu0 %v1919
          %1983 = vmatpush1.bf16.msra.mxu0 %v1918
          %1984 = vmatprep.subr.bf16.mxu0 %v1921
          %1985 = vmatpush1.bf16.msra.mxu0 %v1920
          %1986 = vmatprep.subr.bf16.mxu0 %v1923
          %1987 = vmatpush1.bf16.msra.mxu0 %v1922
          %1988 = vmatprep.subr.bf16.mxu0 %v1925
          %1989 = vmatpush1.bf16.msra.mxu0 %v1924
          %1990 = vmatprep.subr.bf16.mxu0 %v1927
          %1991 = vmatpush1.bf16.msra.mxu0 %v1926
          %1992 = vmatprep.subr.bf16.mxu0 %v1929
          %1993 = vmatpush1.bf16.msra.mxu0 %v1928
          %1994 = vmatprep.subr.bf16.mxu0 %v1931
          %1995 = vmatpush1.bf16.msra.mxu0 %v1930
          %1996 = vmatprep.subr.bf16.mxu0 %v1933
          %1997 = vmatpush1.bf16.msra.mxu0 %v1932
          %1998 = vmatprep.subr.bf16.mxu0 %v1935
          %1999 = vmatpush1.bf16.msra.mxu0 %v1934
          %2000 = vmatprep.subr.bf16.mxu0 %v1937
          %2001 = vmatpush1.bf16.msra.mxu0 %v1936
          %2002 = vmatprep.subr.bf16.mxu0 %v1939
          %2003 = vmatpush1.bf16.msra.mxu0 %v1938
          %2004 = vmatprep.mubr.bf16.mxu0 %v1749
          %2005 = vmatmul.mubr.bf16.gmra.mrb[0].mxu0 %v1748
          %v2006 = vpop.f32.mrb[0].mxu0
          %v2007 = vadd.f32 0.0, %v2006
          %v2008 = vpop.f32.mrb[0].mxu0
          %v2009 = vadd.f32 0.0, %v2008
          %v2010 = vpop.f32.mrb[0].mxu0
          %v2011 = vadd.f32 0.0, %v2010
          %v2012 = vpop.f32.mrb[0].mxu0
          %v2013 = vadd.f32 0.0, %v2012
          %2014 = vmatprep.mubr.bf16.mxu0 %v1751
          %2015 = vmatmul.mubr.bf16.gmra.mrb[0].mxu0 %v1750
          %v2016 = vpop.f32.mrb[0].mxu0
          %v2017 = vadd.f32 0.0, %v2016
          %v2018 = vpop.f32.mrb[0].mxu0
          %v2019 = vadd.f32 0.0, %v2018
          %v2020 = vpop.f32.mrb[0].mxu0
          %v2021 = vadd.f32 0.0, %v2020
          %v2022 = vpop.f32.mrb[0].mxu0
          %v2023 = vadd.f32 0.0, %v2022
          %2024 = vmatprep.mubr.bf16.mxu0 %v1753
          %2025 = vmatmul.mubr.bf16.gmra.mrb[0].mxu0 %v1752
          %v2026 = vpop.f32.mrb[0].mxu0
          %v2027 = vadd.f32 0.0, %v2026
          %v2028 = vpop.f32.mrb[0].mxu0
          %v2029 = vadd.f32 0.0, %v2028
          %v2030 = vpop.f32.mrb[0].mxu0
          %v2031 = vadd.f32 0.0, %v2030
          %v2032 = vpop.f32.mrb[0].mxu0
          %v2033 = vadd.f32 0.0, %v2032
          %2034 = vmatprep.mubr.bf16.mxu0 %v1755
          %2035 = vmatmul.mubr.bf16.gmra.mrb[0].mxu0 %v1754
          %v2036 = vpop.f32.mrb[0].mxu0
          %v2037 = vadd.f32 0.0, %v2036
          %v2038 = vpop.f32.mrb[0].mxu0
          %v2039 = vadd.f32 0.0, %v2038
          %v2040 = vpop.f32.mrb[0].mxu0
          %v2041 = vadd.f32 0.0, %v2040
          %v2042 = vpop.f32.mrb[0].mxu0
          %v2043 = vadd.f32 0.0, %v2042
          %2044 = vmatprep.mubr.bf16.mxu0 %v1757
          %2045 = vmatmul.mubr.bf16.gmra.mrb[0].mxu0 %v1756
          %v2046 = vpop.f32.mrb[0].mxu0
          %v2047 = vadd.f32 0.0, %v2046
          %v2048 = vpop.f32.mrb[0].mxu0
          %v2049 = vadd.f32 0.0, %v2048
          %v2050 = vpop.f32.mrb[0].mxu0
          %v2051 = vadd.f32 0.0, %v2050
          %v2052 = vpop.f32.mrb[0].mxu0
          %v2053 = vadd.f32 0.0, %v2052
          %2054 = vmatprep.mubr.bf16.mxu0 %v1759
          %2055 = vmatmul.mubr.bf16.gmra.mrb[0].mxu0 %v1758
          %v2056 = vpop.f32.mrb[0].mxu0
          %v2057 = vadd.f32 0.0, %v2056
          %v2058 = vpop.f32.mrb[0].mxu0
          %v2059 = vadd.f32 0.0, %v2058
          %v2060 = vpop.f32.mrb[0].mxu0
          %v2061 = vadd.f32 0.0, %v2060
          %v2062 = vpop.f32.mrb[0].mxu0
          %v2063 = vadd.f32 0.0, %v2062
          %2064 = vmatprep.mubr.bf16.mxu0 %v1761
          %2065 = vmatmul.mubr.bf16.gmra.mrb[0].mxu0 %v1760
          %v2066 = vpop.f32.mrb[0].mxu0
          %v2067 = vadd.f32 0.0, %v2066
          %v2068 = vpop.f32.mrb[0].mxu0
          %v2069 = vadd.f32 0.0, %v2068
          %v2070 = vpop.f32.mrb[0].mxu0
          %v2071 = vadd.f32 0.0, %v2070
          %v2072 = vpop.f32.mrb[0].mxu0
          %v2073 = vadd.f32 0.0, %v2072
          %2074 = vmatprep.mubr.bf16.mxu0 %v1763
          %2075 = vmatmul.mubr.bf16.gmra.mrb[0].mxu0 %v1762
          %v2076 = vpop.f32.mrb[0].mxu0
          %v2077 = vadd.f32 0.0, %v2076
          %v2078 = vpop.f32.mrb[0].mxu0
          %v2079 = vadd.f32 0.0, %v2078
          %v2080 = vpop.f32.mrb[0].mxu0
          %v2081 = vadd.f32 0.0, %v2080
          %v2082 = vpop.f32.mrb[0].mxu0
          %v2083 = vadd.f32 0.0, %v2082
          %2084 = vmatprep.mubr.bf16.mxu0 %v1765
          %2085 = vmatmul.mubr.bf16.gmra.mrb[0].mxu0 %v1764
          %v2086 = vpop.f32.mrb[0].mxu0
          %v2087 = vadd.f32 0.0, %v2086
          %v2088 = vpop.f32.mrb[0].mxu0
          %v2089 = vadd.f32 0.0, %v2088
          %v2090 = vpop.f32.mrb[0].mxu0
          %v2091 = vadd.f32 0.0, %v2090
          %v2092 = vpop.f32.mrb[0].mxu0
          %v2093 = vadd.f32 0.0, %v2092
          %2094 = vmatprep.mubr.bf16.mxu0 %v1767
          %2095 = vmatmul.mubr.bf16.gmra.mrb[0].mxu0 %v1766
          %v2096 = vpop.f32.mrb[0].mxu0
          %v2097 = vadd.f32 0.0, %v2096
          %v2098 = vpop.f32.mrb[0].mxu0
          %v2099 = vadd.f32 0.0, %v2098
          %v2100 = vpop.f32.mrb[0].mxu0
          %v2101 = vadd.f32 0.0, %v2100
          %v2102 = vpop.f32.mrb[0].mxu0
          %v2103 = vadd.f32 0.0, %v2102
          %2104 = vmatprep.mubr.bf16.mxu0 %v1769
          %2105 = vmatmul.mubr.bf16.gmra.mrb[0].mxu0 %v1768
          %v2106 = vpop.f32.mrb[0].mxu0
          %v2107 = vadd.f32 0.0, %v2106
          %v2108 = vpop.f32.mrb[0].mxu0
          %v2109 = vadd.f32 0.0, %v2108
          %v2110 = vpop.f32.mrb[0].mxu0
          %v2111 = vadd.f32 0.0, %v2110
          %v2112 = vpop.f32.mrb[0].mxu0
          %v2113 = vadd.f32 0.0, %v2112
          %2114 = vmatprep.mubr.bf16.mxu0 %v1771
          %2115 = vmatmul.mubr.bf16.gmra.mrb[0].mxu0 %v1770
          %v2116 = vpop.f32.mrb[0].mxu0
          %v2117 = vadd.f32 0.0, %v2116
          %v2118 = vpop.f32.mrb[0].mxu0
          %v2119 = vadd.f32 0.0, %v2118
          %v2120 = vpop.f32.mrb[0].mxu0
          %v2121 = vadd.f32 0.0, %v2120
          %v2122 = vpop.f32.mrb[0].mxu0
          %v2123 = vadd.f32 0.0, %v2122
          %2124 = vmatprep.mubr.bf16.mxu0 %v1773
          %2125 = vmatmul.mubr.bf16.gmra.mrb[0].mxu0 %v1772
          %v2126 = vpop.f32.mrb[0].mxu0
          %v2127 = vadd.f32 0.0, %v2126
          %v2128 = vpop.f32.mrb[0].mxu0
          %v2129 = vadd.f32 0.0, %v2128
          %v2130 = vpop.f32.mrb[0].mxu0
          %v2131 = vadd.f32 0.0, %v2130
          %v2132 = vpop.f32.mrb[0].mxu0
          %v2133 = vadd.f32 0.0, %v2132
          %2134 = vmatprep.mubr.bf16.mxu0 %v1775
          %2135 = vmatmul.mubr.bf16.gmra.mrb[0].mxu0 %v1774
          %v2136 = vpop.f32.mrb[0].mxu0
          %v2137 = vadd.f32 0.0, %v2136
          %v2138 = vpop.f32.mrb[0].mxu0
          %v2139 = vadd.f32 0.0, %v2138
          %v2140 = vpop.f32.mrb[0].mxu0
          %v2141 = vadd.f32 0.0, %v2140
          %v2142 = vpop.f32.mrb[0].mxu0
          %v2143 = vadd.f32 0.0, %v2142
          %2144 = vmatprep.mubr.bf16.mxu0 %v1777
          %2145 = vmatmul.mubr.bf16.gmra.mrb[0].mxu0 %v1776
          %v2146 = vpop.f32.mrb[0].mxu0
          %v2147 = vadd.f32 0.0, %v2146
          %v2148 = vpop.f32.mrb[0].mxu0
          %v2149 = vadd.f32 0.0, %v2148
          %v2150 = vpop.f32.mrb[0].mxu0
          %v2151 = vadd.f32 0.0, %v2150
          %v2152 = vpop.f32.mrb[0].mxu0
          %v2153 = vadd.f32 0.0, %v2152
          %2154 = vmatprep.mubr.bf16.mxu0 %v1779
          %2155 = vmatmul.mubr.bf16.gmra.mrb[0].mxu0 %v1778
          %v2156 = vpop.f32.mrb[0].mxu0
          %v2157 = vadd.f32 0.0, %v2156
          %v2158 = vpop.f32.mrb[0].mxu0
          %v2159 = vadd.f32 0.0, %v2158
          %v2160 = vpop.f32.mrb[0].mxu0
          %v2161 = vadd.f32 0.0, %v2160
          %v2162 = vpop.f32.mrb[0].mxu0
          %v2163 = vadd.f32 0.0, %v2162
          %2164 = vdwg.mxu0
          %v2165 = vadd.f32 %v1684, %v2007
          %v2166 = vadd.f32 %v1685, %v2009
          %v2167 = vadd.f32 %v1686, %v2011
          %v2168 = vadd.f32 %v1687, %v2013
          %v2169 = vadd.f32 %v1688, %v2017
          %v2170 = vadd.f32 %v1689, %v2019
          %v2171 = vadd.f32 %v1690, %v2021
          %v2172 = vadd.f32 %v1691, %v2023
          %v2173 = vadd.f32 %v1692, %v2027
          %v2174 = vadd.f32 %v1693, %v2029
          %v2175 = vadd.f32 %v1694, %v2031
          %v2176 = vadd.f32 %v1695, %v2033
          %v2177 = vadd.f32 %v1696, %v2037
          %v2178 = vadd.f32 %v1697, %v2039
          %v2179 = vadd.f32 %v1698, %v2041
          %v2180 = vadd.f32 %v1699, %v2043
          %v2181 = vadd.f32 %v1700, %v2047
          %v2182 = vadd.f32 %v1701, %v2049
          %v2183 = vadd.f32 %v1702, %v2051
          %v2184 = vadd.f32 %v1703, %v2053
          %v2185 = vadd.f32 %v1704, %v2057
          %v2186 = vadd.f32 %v1705, %v2059
          %v2187 = vadd.f32 %v1706, %v2061
          %v2188 = vadd.f32 %v1707, %v2063
          %v2189 = vadd.f32 %v1708, %v2067
          %v2190 = vadd.f32 %v1709, %v2069
          %v2191 = vadd.f32 %v1710, %v2071
          %v2192 = vadd.f32 %v1711, %v2073
          %v2193 = vadd.f32 %v1712, %v2077
          %v2194 = vadd.f32 %v1713, %v2079
          %v2195 = vadd.f32 %v1714, %v2081
          %v2196 = vadd.f32 %v1715, %v2083
          %v2197 = vadd.f32 %v1716, %v2087
          %v2198 = vadd.f32 %v1717, %v2089
          %v2199 = vadd.f32 %v1718, %v2091
          %v2200 = vadd.f32 %v1719, %v2093
          %v2201 = vadd.f32 %v1720, %v2097
          %v2202 = vadd.f32 %v1721, %v2099
          %v2203 = vadd.f32 %v1722, %v2101
          %v2204 = vadd.f32 %v1723, %v2103
          %v2205 = vadd.f32 %v1724, %v2107
          %v2206 = vadd.f32 %v1725, %v2109
          %v2207 = vadd.f32 %v1726, %v2111
          %v2208 = vadd.f32 %v1727, %v2113
          %v2209 = vadd.f32 %v1728, %v2117
          %v2210 = vadd.f32 %v1729, %v2119
          %v2211 = vadd.f32 %v1730, %v2121
          %v2212 = vadd.f32 %v1731, %v2123
          %v2213 = vadd.f32 %v1732, %v2127
          %v2214 = vadd.f32 %v1733, %v2129
          %v2215 = vadd.f32 %v1734, %v2131
          %v2216 = vadd.f32 %v1735, %v2133
          %v2217 = vadd.f32 %v1736, %v2137
          %v2218 = vadd.f32 %v1737, %v2139
          %v2219 = vadd.f32 %v1738, %v2141
          %v2220 = vadd.f32 %v1739, %v2143
          %v2221 = vadd.f32 %v1740, %v2147
          %v2222 = vadd.f32 %v1741, %v2149
          %v2223 = vadd.f32 %v1742, %v2151
          %v2224 = vadd.f32 %v1743, %v2153
          %v2225 = vadd.f32 %v1744, %v2157
          %v2226 = vadd.f32 %v1745, %v2159
          %v2227 = vadd.f32 %v1746, %v2161
          %v2228 = vadd.f32 %v1747, %v2163
          %2229 = vst [vmem:[#allocation2] sm:$0xff] %v2165
          %2230 = vst [vmem:[#allocation2 + $0x8] sm:$0xff] %v2166
          %2231 = vst [vmem:[#allocation2 + $0x10] sm:$0xff] %v2167
          %2232 = vst [vmem:[#allocation2 + $0x18] sm:$0xff] %v2168
          %2233 = vst [vmem:[#allocation2 + $0x20] sm:$0xff] %v2169
          %2234 = vst [vmem:[#allocation2 + $0x28] sm:$0xff] %v2170
          %2235 = vst [vmem:[#allocation2 + $0x30] sm:$0xff] %v2171
          %2236 = vst [vmem:[#allocation2 + $0x38] sm:$0xff] %v2172
          %2237 = vst [vmem:[#allocation2 + $0x40] sm:$0xff] %v2173
          %2238 = vst [vmem:[#allocation2 + $0x48] sm:$0xff] %v2174
          %2239 = vst [vmem:[#allocation2 + $0x50] sm:$0xff] %v2175
          %2240 = vst [vmem:[#allocation2 + $0x58] sm:$0xff] %v2176
          %2241 = vst [vmem:[#allocation2 + $0x60] sm:$0xff] %v2177
          %2242 = vst [vmem:[#allocation2 + $0x68] sm:$0xff] %v2178
          %2243 = vst [vmem:[#allocation2 + $0x70] sm:$0xff] %v2179
          %2244 = vst [vmem:[#allocation2 + $0x78] sm:$0xff] %v2180
          %2245 = vst [vmem:[#allocation2 + $0x80] sm:$0xff] %v2181
          %2246 = vst [vmem:[#allocation2 + $0x88] sm:$0xff] %v2182
          %2247 = vst [vmem:[#allocation2 + $0x90] sm:$0xff] %v2183
          %2248 = vst [vmem:[#allocation2 + $0x98] sm:$0xff] %v2184
          %2249 = vst [vmem:[#allocation2 + $0xa0] sm:$0xff] %v2185
          %2250 = vst [vmem:[#allocation2 + $0xa8] sm:$0xff] %v2186
          %2251 = vst [vmem:[#allocation2 + $0xb0] sm:$0xff] %v2187
          %2252 = vst [vmem:[#allocation2 + $0xb8] sm:$0xff] %v2188
          %2253 = vst [vmem:[#allocation2 + $0xc0] sm:$0xff] %v2189
          %2254 = vst [vmem:[#allocation2 + $0xc8] sm:$0xff] %v2190
          %2255 = vst [vmem:[#allocation2 + $0xd0] sm:$0xff] %v2191
          %2256 = vst [vmem:[#allocation2 + $0xd8] sm:$0xff] %v2192
          %2257 = vst [vmem:[#allocation2 + $0xe0] sm:$0xff] %v2193
          %2258 = vst [vmem:[#allocation2 + $0xe8] sm:$0xff] %v2194
          %2259 = vst [vmem:[#allocation2 + $0xf0] sm:$0xff] %v2195
          %2260 = vst [vmem:[#allocation2 + $0xf8] sm:$0xff] %v2196
          %2261 = vst [vmem:[#allocation2 + $0x100] sm:$0xff] %v2197
          %2262 = vst [vmem:[#allocation2 + $0x108] sm:$0xff] %v2198
          %2263 = vst [vmem:[#allocation2 + $0x110] sm:$0xff] %v2199
          %2264 = vst [vmem:[#allocation2 + $0x118] sm:$0xff] %v2200
          %2265 = vst [vmem:[#allocation2 + $0x120] sm:$0xff] %v2201
          %2266 = vst [vmem:[#allocation2 + $0x128] sm:$0xff] %v2202
          %2267 = vst [vmem:[#allocation2 + $0x130] sm:$0xff] %v2203
          %2268 = vst [vmem:[#allocation2 + $0x138] sm:$0xff] %v2204
          %2269 = vst [vmem:[#allocation2 + $0x140] sm:$0xff] %v2205
          %2270 = vst [vmem:[#allocation2 + $0x148] sm:$0xff] %v2206
          %2271 = vst [vmem:[#allocation2 + $0x150] sm:$0xff] %v2207
          %2272 = vst [vmem:[#allocation2 + $0x158] sm:$0xff] %v2208
          %2273 = vst [vmem:[#allocation2 + $0x160] sm:$0xff] %v2209
          %2274 = vst [vmem:[#allocation2 + $0x168] sm:$0xff] %v2210
          %2275 = vst [vmem:[#allocation2 + $0x170] sm:$0xff] %v2211
          %2276 = vst [vmem:[#allocation2 + $0x178] sm:$0xff] %v2212
          %2277 = vst [vmem:[#allocation2 + $0x180] sm:$0xff] %v2213
          %2278 = vst [vmem:[#allocation2 + $0x188] sm:$0xff] %v2214
          %2279 = vst [vmem:[#allocation2 + $0x190] sm:$0xff] %v2215
          %2280 = vst [vmem:[#allocation2 + $0x198] sm:$0xff] %v2216
          %2281 = vst [vmem:[#allocation2 + $0x1a0] sm:$0xff] %v2217
          %2282 = vst [vmem:[#allocation2 + $0x1a8] sm:$0xff] %v2218
          %2283 = vst [vmem:[#allocation2 + $0x1b0] sm:$0xff] %v2219
          %2284 = vst [vmem:[#allocation2 + $0x1b8] sm:$0xff] %v2220
          %2285 = vst [vmem:[#allocation2 + $0x1c0] sm:$0xff] %v2221
          %2286 = vst [vmem:[#allocation2 + $0x1c8] sm:$0xff] %v2222
          %2287 = vst [vmem:[#allocation2 + $0x1d0] sm:$0xff] %v2223
          %2288 = vst [vmem:[#allocation2 + $0x1d8] sm:$0xff] %v2224
          %2289 = vst [vmem:[#allocation2 + $0x1e0] sm:$0xff] %v2225
          %2290 = vst [vmem:[#allocation2 + $0x1e8] sm:$0xff] %v2226
          %2291 = vst [vmem:[#allocation2 + $0x1f0] sm:$0xff] %v2227
          %2292 = vst [vmem:[#allocation2 + $0x1f8] sm:$0xff] %v2228
          %p2293 = scmp.eq.s32.totalorder %s42, 1
          // Predicated region
          $region65: #{_expert_pallas.1} parent=59 // pred_check
            %p2294 = pneg %p2293
          $region66: #{_expert_pallas.1} parent=59 // pred_check_branch
            %2296 = sbr.rel (%p2294) target = $region68
          $region67: #{_expert_pallas.1} parent=59 // pred_region
            %v2297 = vld [vmem:[#allocation2] sm:$0xff]
            %v2298 = vld [vmem:[#allocation2 + $0x8] sm:$0xff]
            %v2299 = vld [vmem:[#allocation2 + $0x10] sm:$0xff]
            %v2300 = vld [vmem:[#allocation2 + $0x18] sm:$0xff]
            %v2301 = vld [vmem:[#allocation2 + $0x20] sm:$0xff]
            %v2302 = vld [vmem:[#allocation2 + $0x28] sm:$0xff]
            %v2303 = vld [vmem:[#allocation2 + $0x30] sm:$0xff]
            %v2304 = vld [vmem:[#allocation2 + $0x38] sm:$0xff]
            %v2305 = vld [vmem:[#allocation2 + $0x40] sm:$0xff]
            %v2306 = vld [vmem:[#allocation2 + $0x48] sm:$0xff]
            %v2307 = vld [vmem:[#allocation2 + $0x50] sm:$0xff]
            %v2308 = vld [vmem:[#allocation2 + $0x58] sm:$0xff]
            %v2309 = vld [vmem:[#allocation2 + $0x60] sm:$0xff]
            %v2310 = vld [vmem:[#allocation2 + $0x68] sm:$0xff]
            %v2311 = vld [vmem:[#allocation2 + $0x70] sm:$0xff]
            %v2312 = vld [vmem:[#allocation2 + $0x78] sm:$0xff]
            %v2313 = vld [vmem:[#allocation2 + $0x80] sm:$0xff]
            %v2314 = vld [vmem:[#allocation2 + $0x88] sm:$0xff]
            %v2315 = vld [vmem:[#allocation2 + $0x90] sm:$0xff]
            %v2316 = vld [vmem:[#allocation2 + $0x98] sm:$0xff]
            %v2317 = vld [vmem:[#allocation2 + $0xa0] sm:$0xff]
            %v2318 = vld [vmem:[#allocation2 + $0xa8] sm:$0xff]
            %v2319 = vld [vmem:[#allocation2 + $0xb0] sm:$0xff]
            %v2320 = vld [vmem:[#allocation2 + $0xb8] sm:$0xff]
            %v2321 = vld [vmem:[#allocation2 + $0xc0] sm:$0xff]
            %v2322 = vld [vmem:[#allocation2 + $0xc8] sm:$0xff]
            %v2323 = vld [vmem:[#allocation2 + $0xd0] sm:$0xff]
            %v2324 = vld [vmem:[#allocation2 + $0xd8] sm:$0xff]
            %v2325 = vld [vmem:[#allocation2 + $0xe0] sm:$0xff]
            %v2326 = vld [vmem:[#allocation2 + $0xe8] sm:$0xff]
            %v2327 = vld [vmem:[#allocation2 + $0xf0] sm:$0xff]
            %v2328 = vld [vmem:[#allocation2 + $0xf8] sm:$0xff]
            %v2329 = vld [vmem:[#allocation2 + $0x100] sm:$0xff]
            %v2330 = vld [vmem:[#allocation2 + $0x108] sm:$0xff]
            %v2331 = vld [vmem:[#allocation2 + $0x110] sm:$0xff]
            %v2332 = vld [vmem:[#allocation2 + $0x118] sm:$0xff]
            %v2333 = vld [vmem:[#allocation2 + $0x120] sm:$0xff]
            %v2334 = vld [vmem:[#allocation2 + $0x128] sm:$0xff]
            %v2335 = vld [vmem:[#allocation2 + $0x130] sm:$0xff]
            %v2336 = vld [vmem:[#allocation2 + $0x138] sm:$0xff]
            %v2337 = vld [vmem:[#allocation2 + $0x140] sm:$0xff]
            %v2338 = vld [vmem:[#allocation2 + $0x148] sm:$0xff]
            %v2339 = vld [vmem:[#allocation2 + $0x150] sm:$0xff]
            %v2340 = vld [vmem:[#allocation2 + $0x158] sm:$0xff]
            %v2341 = vld [vmem:[#allocation2 + $0x160] sm:$0xff]
            %v2342 = vld [vmem:[#allocation2 + $0x168] sm:$0xff]
            %v2343 = vld [vmem:[#allocation2 + $0x170] sm:$0xff]
            %v2344 = vld [vmem:[#allocation2 + $0x178] sm:$0xff]
            %v2345 = vld [vmem:[#allocation2 + $0x180] sm:$0xff]
            %v2346 = vld [vmem:[#allocation2 + $0x188] sm:$0xff]
            %v2347 = vld [vmem:[#allocation2 + $0x190] sm:$0xff]
            %v2348 = vld [vmem:[#allocation2 + $0x198] sm:$0xff]
            %v2349 = vld [vmem:[#allocation2 + $0x1a0] sm:$0xff]
            %v2350 = vld [vmem:[#allocation2 + $0x1a8] sm:$0xff]
            %v2351 = vld [vmem:[#allocation2 + $0x1b0] sm:$0xff]
            %v2352 = vld [vmem:[#allocation2 + $0x1b8] sm:$0xff]
            %v2353 = vld [vmem:[#allocation2 + $0x1c0] sm:$0xff]
            %v2354 = vld [vmem:[#allocation2 + $0x1c8] sm:$0xff]
            %v2355 = vld [vmem:[#allocation2 + $0x1d0] sm:$0xff]
            %v2356 = vld [vmem:[#allocation2 + $0x1d8] sm:$0xff]
            %v2357 = vld [vmem:[#allocation2 + $0x1e0] sm:$0xff]
            %v2358 = vld [vmem:[#allocation2 + $0x1e8] sm:$0xff]
            %v2359 = vld [vmem:[#allocation2 + $0x1f0] sm:$0xff]
            %v2360 = vld [vmem:[#allocation2 + $0x1f8] sm:$0xff]
            %v2361 = vpack.c.bf16 %v2299, %v2297
            %v2362 = vpack.c.bf16 %v2300, %v2298
            %v2363 = vpack.c.bf16 %v2303, %v2301
            %v2364 = vpack.c.bf16 %v2304, %v2302
            %v2365 = vpack.c.bf16 %v2307, %v2305
            %v2366 = vpack.c.bf16 %v2308, %v2306
            %v2367 = vpack.c.bf16 %v2311, %v2309
            %v2368 = vpack.c.bf16 %v2312, %v2310
            %v2369 = vpack.c.bf16 %v2315, %v2313
            %v2370 = vpack.c.bf16 %v2316, %v2314
            %v2371 = vpack.c.bf16 %v2319, %v2317
            %v2372 = vpack.c.bf16 %v2320, %v2318
            %v2373 = vpack.c.bf16 %v2323, %v2321
            %v2374 = vpack.c.bf16 %v2324, %v2322
            %v2375 = vpack.c.bf16 %v2327, %v2325
            %v2376 = vpack.c.bf16 %v2328, %v2326
            %v2377 = vpack.c.bf16 %v2331, %v2329
            %v2378 = vpack.c.bf16 %v2332, %v2330
            %v2379 = vpack.c.bf16 %v2335, %v2333
            %v2380 = vpack.c.bf16 %v2336, %v2334
            %v2381 = vpack.c.bf16 %v2339, %v2337
            %v2382 = vpack.c.bf16 %v2340, %v2338
            %v2383 = vpack.c.bf16 %v2343, %v2341
            %v2384 = vpack.c.bf16 %v2344, %v2342
            %v2385 = vpack.c.bf16 %v2347, %v2345
            %v2386 = vpack.c.bf16 %v2348, %v2346
            %v2387 = vpack.c.bf16 %v2351, %v2349
            %v2388 = vpack.c.bf16 %v2352, %v2350
            %v2389 = vpack.c.bf16 %v2355, %v2353
            %v2390 = vpack.c.bf16 %v2356, %v2354
            %v2391 = vpack.c.bf16 %v2359, %v2357
            %v2392 = vpack.c.bf16 %v2360, %v2358
            %v2425 = vunpack.c.l.b16 %v2361
            %v2426 = vunpack.c.l.b16 %v2362
            %v2427 = vunpack.c.h.b16 %v2361
            %v2428 = vunpack.c.h.b16 %v2362
            %v2429 = vunpack.c.l.b16 %v2363
            %v2430 = vunpack.c.l.b16 %v2364
            %v2431 = vunpack.c.h.b16 %v2363
            %v2432 = vunpack.c.h.b16 %v2364
            %v2433 = vunpack.c.l.b16 %v2365
            %v2434 = vunpack.c.l.b16 %v2366
            %v2435 = vunpack.c.h.b16 %v2365
            %v2436 = vunpack.c.h.b16 %v2366
            %v2437 = vunpack.c.l.b16 %v2367
            %v2438 = vunpack.c.l.b16 %v2368
            %v2439 = vunpack.c.h.b16 %v2367
            %v2440 = vunpack.c.h.b16 %v2368
            %v2441 = vunpack.c.l.b16 %v2369
            %v2442 = vunpack.c.l.b16 %v2370
            %v2443 = vunpack.c.h.b16 %v2369
            %v2444 = vunpack.c.h.b16 %v2370
            %v2445 = vunpack.c.l.b16 %v2371
            %v2446 = vunpack.c.l.b16 %v2372
            %v2447 = vunpack.c.h.b16 %v2371
            %v2448 = vunpack.c.h.b16 %v2372
            %v2449 = vunpack.c.l.b16 %v2373
            %v2450 = vunpack.c.l.b16 %v2374
            %v2451 = vunpack.c.h.b16 %v2373
            %v2452 = vunpack.c.h.b16 %v2374
            %v2453 = vunpack.c.l.b16 %v2375
            %v2454 = vunpack.c.l.b16 %v2376
            %v2455 = vunpack.c.h.b16 %v2375
            %v2456 = vunpack.c.h.b16 %v2376
            %v2457 = vunpack.c.l.b16 %v2377
            %v2458 = vunpack.c.l.b16 %v2378
            %v2459 = vunpack.c.h.b16 %v2377
            %v2460 = vunpack.c.h.b16 %v2378
            %v2461 = vunpack.c.l.b16 %v2379
            %v2462 = vunpack.c.l.b16 %v2380
            %v2463 = vunpack.c.h.b16 %v2379
            %v2464 = vunpack.c.h.b16 %v2380
            %v2465 = vunpack.c.l.b16 %v2381
            %v2466 = vunpack.c.l.b16 %v2382
            %v2467 = vunpack.c.h.b16 %v2381
            %v2468 = vunpack.c.h.b16 %v2382
            %v2469 = vunpack.c.l.b16 %v2383
            %v2470 = vunpack.c.l.b16 %v2384
            %v2471 = vunpack.c.h.b16 %v2383
            %v2472 = vunpack.c.h.b16 %v2384
            %v2473 = vunpack.c.l.b16 %v2385
            %v2474 = vunpack.c.l.b16 %v2386
            %v2475 = vunpack.c.h.b16 %v2385
            %v2476 = vunpack.c.h.b16 %v2386
            %v2477 = vunpack.c.l.b16 %v2387
            %v2478 = vunpack.c.l.b16 %v2388
            %v2479 = vunpack.c.h.b16 %v2387
            %v2480 = vunpack.c.h.b16 %v2388
            %v2481 = vunpack.c.l.b16 %v2389
            %v2482 = vunpack.c.l.b16 %v2390
            %v2483 = vunpack.c.h.b16 %v2389
            %v2484 = vunpack.c.h.b16 %v2390
            %v2485 = vunpack.c.l.b16 %v2391
            %v2486 = vunpack.c.l.b16 %v2392
            %v2487 = vunpack.c.h.b16 %v2391
            %v2488 = vunpack.c.h.b16 %v2392
            %v2489 = vpack.c.b16 %v2426, %v2425
            %v2490 = vpack.c.b16 %v2428, %v2427
            %v2491 = vpack.c.b16 %v2430, %v2429
            %v2492 = vpack.c.b16 %v2432, %v2431
            %v2493 = vpack.c.b16 %v2434, %v2433
            %v2494 = vpack.c.b16 %v2436, %v2435
            %v2495 = vpack.c.b16 %v2438, %v2437
            %v2496 = vpack.c.b16 %v2440, %v2439
            %v2497 = vpack.c.b16 %v2442, %v2441
            %v2498 = vpack.c.b16 %v2444, %v2443
            %v2499 = vpack.c.b16 %v2446, %v2445
            %v2500 = vpack.c.b16 %v2448, %v2447
            %v2501 = vpack.c.b16 %v2450, %v2449
            %v2502 = vpack.c.b16 %v2452, %v2451
            %v2503 = vpack.c.b16 %v2454, %v2453
            %v2504 = vpack.c.b16 %v2456, %v2455
            %v2505 = vpack.c.b16 %v2458, %v2457
            %v2506 = vpack.c.b16 %v2460, %v2459
            %v2507 = vpack.c.b16 %v2462, %v2461
            %v2508 = vpack.c.b16 %v2464, %v2463
            %v2509 = vpack.c.b16 %v2466, %v2465
            %v2510 = vpack.c.b16 %v2468, %v2467
            %v2511 = vpack.c.b16 %v2470, %v2469
            %v2512 = vpack.c.b16 %v2472, %v2471
            %v2513 = vpack.c.b16 %v2474, %v2473
            %v2514 = vpack.c.b16 %v2476, %v2475
            %v2515 = vpack.c.b16 %v2478, %v2477
            %v2516 = vpack.c.b16 %v2480, %v2479
            %v2517 = vpack.c.b16 %v2482, %v2481
            %v2518 = vpack.c.b16 %v2484, %v2483
            %v2519 = vpack.c.b16 %v2486, %v2485
            %v2520 = vpack.c.b16 %v2488, %v2487
            %2553 = vst [vmem:[%s419] sm:$0xff] %v2489
            %2554 = vst [vmem:[%s419 + $0x8] sm:$0xff] %v2490
            %2555 = vst [vmem:[%s419 + $0x10] sm:$0xff] %v2491
            %2556 = vst [vmem:[%s419 + $0x18] sm:$0xff] %v2492
            %2557 = vst [vmem:[%s419 + $0x20] sm:$0xff] %v2493
            %2558 = vst [vmem:[%s419 + $0x28] sm:$0xff] %v2494
            %2559 = vst [vmem:[%s419 + $0x30] sm:$0xff] %v2495
            %2560 = vst [vmem:[%s419 + $0x38] sm:$0xff] %v2496
            %2561 = vst [vmem:[%s419 + $0x40] sm:$0xff] %v2497
            %2562 = vst [vmem:[%s419 + $0x48] sm:$0xff] %v2498
            %2563 = vst [vmem:[%s419 + $0x50] sm:$0xff] %v2499
            %2564 = vst [vmem:[%s419 + $0x58] sm:$0xff] %v2500
            %2565 = vst [vmem:[%s419 + $0x60] sm:$0xff] %v2501
            %2566 = vst [vmem:[%s419 + $0x68] sm:$0xff] %v2502
            %2567 = vst [vmem:[%s419 + $0x70] sm:$0xff] %v2503
            %2568 = vst [vmem:[%s419 + $0x78] sm:$0xff] %v2504
            %2569 = vst [vmem:[%s419 + $0x80] sm:$0xff] %v2505
            %2570 = vst [vmem:[%s419 + $0x88] sm:$0xff] %v2506
            %2571 = vst [vmem:[%s419 + $0x90] sm:$0xff] %v2507
            %2572 = vst [vmem:[%s419 + $0x98] sm:$0xff] %v2508
            %2573 = vst [vmem:[%s419 + $0xa0] sm:$0xff] %v2509
            %2574 = vst [vmem:[%s419 + $0xa8] sm:$0xff] %v2510
            %2575 = vst [vmem:[%s419 + $0xb0] sm:$0xff] %v2511
            %2576 = vst [vmem:[%s419 + $0xb8] sm:$0xff] %v2512
            %2577 = vst [vmem:[%s419 + $0xc0] sm:$0xff] %v2513
            %2578 = vst [vmem:[%s419 + $0xc8] sm:$0xff] %v2514
            %2579 = vst [vmem:[%s419 + $0xd0] sm:$0xff] %v2515
            %2580 = vst [vmem:[%s419 + $0xd8] sm:$0xff] %v2516
            %2581 = vst [vmem:[%s419 + $0xe0] sm:$0xff] %v2517
            %2582 = vst [vmem:[%s419 + $0xe8] sm:$0xff] %v2518
            %2583 = vst [vmem:[%s419 + $0xf0] sm:$0xff] %v2519
            %2584 = vst [vmem:[%s419 + $0xf8] sm:$0xff] %v2520
          $region68: #{_expert_pallas.1} parent=59 // pred_fallthru
            _
        $region60: #{_expert_pallas.1} parent=39 // pred_fallthru
          _
        %s2585 = sand.u32 %s201, 1
        %s2586 = scalar_lea.sflag [#allocation8], %s2585
        %s2587 = sand.u32 %s201, 1
        %s2588 = smul.addr %s2587, 256
        %s2589 = scalar_lea.vmem [#allocation14], %s2588
        // Predicated region
        $region69: #{_expert_pallas.1} parent=39 // pred_check
          %p2590 = pneg %p211
        $region70: #{_expert_pallas.1} parent=39 // pred_check_branch
          %2592 = sbr.rel (%p2590) target = $region72
        $region71: #{_expert_pallas.1} parent=39 // pred_region
          %s2593 = smul.u32 32, %s41
          %s2595 = ssub.s32 4096, 4096
          %2596 = vsyncadd %s2586, %s2595
          %s2597 = smul.addr %s2593, 2
          %s2598 = smul.addr %s2597, 64
          %s2599 = scalar_lea.hbm %s7, %s2598
          %s2600 = sshll.u32 %s2589, 4
          %s2601 = int_to_ptr.vmem [resolvable:$true] %s2600
          %2606 = dma.vmem_to_hbm [thread:$0]  %s2601, 4096, %s2599, %s2586, 128, 128, 8
        $region72: #{_expert_pallas.1} parent=39 // pred_fallthru
          _
      $region40: #{_expert_pallas.1} parent=5 // pred_fallthru
        _
      %p2607 = scmp.le.s32.totalorder 2, %s32
      // Predicated region
      $region73: #{_expert_pallas.1} parent=5 // pred_check
        %p2608 = pneg %p2607
      $region74: #{_expert_pallas.1} parent=5 // pred_check_branch
        %2610 = sbr.rel (%p2608) target = $region76
      $region75: #{_expert_pallas.1} parent=5 // pred_region
        %s2611 = ssub.s32 %s32, 2
        // Predicated region
        $region77: #{_expert_pallas.1} parent=75 // pred_check
          %p2612 = pneg %p217
        $region78: #{_expert_pallas.1} parent=75 // pred_check_branch
          %2614 = sbr.rel (%p2612) target = $region80
        $region79: #{_expert_pallas.1} parent=75 // pred_region
          %s2615 = sand.u32 %s202, 1
          %s2616 = scalar_lea.sflag [#allocation8], %s2615
          %s2617 = sand.u32 %s202, 1
          %s2618 = smul.addr %s2617, 256
          %s2619 = scalar_lea.vmem [#allocation14], %s2618
          %2620 = dma.done %s2616, 4096
        $region80: #{_expert_pallas.1} parent=75 // pred_fallthru
          _
      $region76: #{_expert_pallas.1} parent=5 // pred_fallthru
        _
    $region6: #{_expert_pallas.1} parent=1 // loop_footer
      %s36 = sadd.s32 1, %s32
    $region7: #{_expert_pallas.1} parent=1 // loop_footer_branch
      %31 = sbr.rel target = $region3
    $region8: #{_expert_pallas.1} parent=1 // loop_exit
      _
    %2621 = vsyncpa [#allocation7], 1
    %s2622 = scalar_lea.sflag [#allocation7], 1
    %2623 = vsyncpa %s2622, 1
    %2624 = vsyncpa [#allocation10], 1
    %s2625 = scalar_lea.sflag [#allocation10], 1
    %2626 = vsyncpa %s2625, 1
    %2627 = vsyncpa [#allocation13], 1
    %s2628 = scalar_lea.sflag [#allocation13], 1
    %2629 = vsyncpa %s2628, 1
    %2630 = vsyncpa [#allocation8], 1
    %s2631 = scalar_lea.sflag [#allocation8], 1
    %2632 = vsyncpa %s2631, 1

</llo_original>
